<compile_context>
chip_gen: v6e
topology: v6e:2x2x1
jax: 0.10.0
libtpu: 0.0.40
codegen_flags: <defaults>
</compile_context>

<pallas_src>
import jax
import jax.numpy as jnp
from jax.experimental import pallas as pl
from jax.experimental.pallas import tpu as pltpu

# ---- problem sizes (small, consistent with gvt's DepthWiseConv2d usage) ----
B = 2
C_IN = 32
C_OUT = 64
H_IN = W_IN = 16
K = 3
PAD = 1
STRIDE = 1
assert STRIDE == 1, "stride=1 path only"
H_OUT = (H_IN + 2 * PAD - K) // STRIDE + 1   # 16
W_OUT = (W_IN + 2 * PAD - K) // STRIDE + 1   # 16
H_PAD = H_IN + 2 * PAD                       # 18
W_PAD = W_IN + 2 * PAD                       # 18
BN_EPS = 1e-5

# flattened-spatial (lane) sizes
L_OUT = H_OUT * W_PAD                        # 288: output rows keep stride W_PAD
L_IN = 384                                   # 324 real lanes + zero pad -> 3*128
PACK_COLS = C_IN + 1 + K * K                 # packed params: w_pw | bias | taps

# NOTE(v7x): set BATCH_GRID = B to split the batch across the two TensorCores
# (dimension_semantics then becomes ("parallel",)).  On v5e/v6e (1 TC) keep
# the batch collapsed into a single grid step to avoid per-step overhead.
BATCH_GRID = 1


def dwconv_kernel(x_ref, p_ref, o_ref):
    # x_ref: (bpg, C_IN, L_IN)  zero-padded, spatially-flattened NCHW input.
    # p_ref: (C_OUT, PACK_COLS) packed params:
    #        [:, :C_IN]      = pointwise weight (C_OUT, C_IN)
    #        [:,  C_IN]      = fused output bias (BN shift + dw bias folded in)
    #        [:C_IN, C_IN+1:] = BN-scaled depthwise taps (C_IN, K*K)
    # o_ref: (bpg, C_OUT, L_OUT)
    nb = x_ref.shape[0]

    pk = p_ref[...]                                   # single small load
    w_pw = pk[:, :C_IN]                               # (C_OUT, C_IN)
    bias = pk[:, C_IN:C_IN + 1]                       # (C_OUT, 1)
    taps = pk[:C_IN, C_IN + 1:]                       # (C_IN, K*K)

    # ---- depthwise KxK conv: K*K statically-unrolled shifted-window FMAs ---
    # Each tap's window is one uniform lane shift (ky*W_PAD + kx) because the
    # accumulator keeps the padded row stride; garbage cols are sliced off in
    # the wrapper.  BN scale is already folded into `taps`.
    acc = None
    for idx in range(K * K):
        ky, kx = divmod(idx, K)
        off = ky * W_PAD + kx
        win = x_ref[:, :, pl.ds(off, L_OUT)]          # (bpg, C_IN, L_OUT)
        tap = taps[:, idx:idx + 1].reshape(1, C_IN, 1)  # per-channel, no relayout
        contrib = win * tap
        acc = contrib if acc is None else acc + contrib

    # ---- pointwise 1x1 conv + fused bias: per-image MXU matmul -------------
    for b in range(nb):                               # static unroll (bpg <= 2)
        out_b = jnp.dot(w_pw, acc[b], preferred_element_type=jnp.float32)
        o_ref[b] = out_b + bias                       # bias broadcasts on lanes


def fold_params(p):
    """Fold eval-mode BN + depthwise bias into conv weights (all in f32)."""
    scale = jax.lax.rsqrt(p["bn_var"] + BN_EPS) * p["bn_gamma"]      # (C_IN,)
    shift = p["bn_beta"] + (p["b_dw"] - p["bn_mean"]) * scale        # (C_IN,)
    taps = p["w_dw"].reshape(C_IN, K * K) * scale[:, None]           # (C_IN, K*K)
    bias = p["b_pw"] + p["w_pw"] @ shift                             # (C_OUT,)
    pack = jnp.zeros((C_OUT, PACK_COLS), jnp.float32)
    pack = pack.at[:, :C_IN].set(p["w_pw"].astype(jnp.float32))
    pack = pack.at[:, C_IN].set(bias)
    pack = pack.at[:C_IN, C_IN + 1:].set(taps)
    return pack


def depthwise_conv2d_forward(x_nchw, params, batch_grid=BATCH_GRID):
    """Forward pass matching DepthWiseConv2d (eval-mode BN) on NCHW input."""
    assert B % batch_grid == 0
    bpg = B // batch_grid

    x = x_nchw.astype(jnp.float32)
    x_pad = jnp.pad(x, ((0, 0), (0, 0), (PAD, PAD), (PAD, PAD)))
    x_flat = x_pad.reshape(B, C_IN, H_PAD * W_PAD)
    x_flat = jnp.pad(x_flat, ((0, 0), (0, 0), (0, L_IN - H_PAD * W_PAD)))
    pack = fold_params(params)

    out_flat = pl.pallas_call(
        dwconv_kernel,
        out_shape=jax.ShapeDtypeStruct((B, C_OUT, L_OUT), jnp.float32),
        grid_spec=pltpu.PrefetchScalarGridSpec(
            num_scalar_prefetch=0,
            grid=(batch_grid,),
            in_specs=[
                pl.BlockSpec((bpg, C_IN, L_IN), lambda i: (i, 0, 0)),
                pl.BlockSpec((C_OUT, PACK_COLS), lambda i: (0, 0)),
            ],
            out_specs=pl.BlockSpec((bpg, C_OUT, L_OUT), lambda i: (i, 0, 0)),
        ),
        compiler_params=pltpu.CompilerParams(
            dimension_semantics=(
                ("parallel",) if batch_grid > 1 else ("arbitrary",))),
    )(x_flat, pack)

    # Drop the 2 padded garbage columns per output row; result is already NCHW.
    return out_flat.reshape(B, C_OUT, H_OUT, W_PAD)[:, :, :, :W_OUT]


def make_params(key):
    ks = jax.random.split(key, 8)
    init = lambda k, shape, s=0.1: jax.random.normal(k, shape, jnp.float32) * s
    return {
        # PyTorch-layout depthwise taps: w_dw[c, ky, kx] == torch_weight[c,0,ky,kx]
        "w_dw": init(ks[0], (C_IN, K, K)),
        "b_dw": init(ks[1], (C_IN,)),
        # BatchNorm2d (inference-mode running stats + affine)
        "bn_gamma": 1.0 + init(ks[2], (C_IN,)),
        "bn_beta": init(ks[3], (C_IN,)),
        "bn_mean": init(ks[4], (C_IN,)),
        "bn_var": 1.0 + jnp.abs(init(ks[5], (C_IN,))),
        # PyTorch-layout 1x1 conv: w_pw[co, c] == torch_weight[co, c, 0, 0]
        "w_pw": init(ks[6], (C_OUT, C_IN)),
        "b_pw": init(ks[7], (C_OUT,)),
    }


def depthwise_conv2d_reference(x_nchw, p):
    """Pure-JAX reference mirroring the PyTorch module (eval-mode BN)."""
    w_dw = p["w_dw"][:, None, :, :]                    # (C_IN, 1, K, K) OIHW
    y = jax.lax.conv_general_dilated(
        x_nchw, w_dw, window_strides=(STRIDE, STRIDE),
        padding=((PAD, PAD), (PAD, PAD)),
        dimension_numbers=("NCHW", "OIHW", "NCHW"),
        feature_group_count=C_IN)
    y = y + p["b_dw"][None, :, None, None]

    inv_std = jax.lax.rsqrt(p["bn_var"] + BN_EPS)
    scale = (p["bn_gamma"] * inv_std)[None, :, None, None]
    shift = (p["bn_beta"] - p["bn_mean"] * p["bn_gamma"] * inv_std)[None, :, None, None]
    y = y * scale + shift

    w_pw = p["w_pw"][:, :, None, None]                 # (C_OUT, C_IN, 1, 1)
    out = jax.lax.conv_general_dilated(
        y, w_pw, window_strides=(1, 1), padding=((0, 0), (0, 0)),
        dimension_numbers=("NCHW", "OIHW", "NCHW"))
    return out + p["b_pw"][None, :, None, None]


if __name__ == "__main__":
    key = jax.random.PRNGKey(0)
    kx, kp = jax.random.split(key)
    x = jax.random.normal(kx, (B, C_IN, H_IN, W_IN), jnp.float32)
    params = make_params(kp)

    out = depthwise_conv2d_forward(x, params)
    jax.block_until_ready(out)

    ref = depthwise_conv2d_reference(x, params)
    err = float(jnp.max(jnp.abs(out - ref)))
    assert jnp.allclose(out, ref, atol=1e-4, rtol=1e-4), f"max abs err {err}"
    print("KERNEL_OK")
</pallas_src>

<mosaic_0001>
module attributes {stable_mosaic.version = 11 : i64} {
  func.func @dwconv_kernel(%arg0: i32, %arg1: memref<2x32x384xf32, #tpu.memory_space<vmem>>, %arg2: memref<64x42xf32, #tpu.memory_space<vmem>>, %arg3: memref<2x64x288xf32, #tpu.memory_space<vmem>>) attributes {dimension_semantics = [#tpu.dimension_semantics<arbitrary>], iteration_bounds = array<i64: 1>, scalar_prefetch = 0 : i64, scratch_operands = 0 : i64, tpu.core_type = #tpu.core_type<tc>, window_params = [{transform_indices = @transform_0, window_bounds = array<i64: 2, 32, 384>}, {pipeline_mode = #tpu.pipeline_mode<synchronous>, transform_indices = @transform_1, window_bounds = array<i64: 64, 42>}, {transform_indices = @transform_2, window_bounds = array<i64: 2, 64, 288>}]} {
    %c0 = arith.constant 0 : index
    %c0_0 = arith.constant 0 : index
    %0 = vector.load %arg2[%c0, %c0_0] : memref<64x42xf32, #tpu.memory_space<vmem>>, vector<64x42xf32>
    %1 = vector.extract_strided_slice %0 {offsets = [0, 0], sizes = [64, 32], strides = [1, 1]} : vector<64x42xf32> to vector<64x32xf32>
    %2 = vector.extract_strided_slice %0 {offsets = [0, 32], sizes = [64, 1], strides = [1, 1]} : vector<64x42xf32> to vector<64x1xf32>
    %3 = vector.extract_strided_slice %0 {offsets = [0, 33], sizes = [32, 9], strides = [1, 1]} : vector<64x42xf32> to vector<32x9xf32>
    %c0_1 = arith.constant 0 : index
    %c0_2 = arith.constant 0 : index
    %c0_3 = arith.constant 0 : index
    %4 = vector.load %arg1[%c0_1, %c0_2, %c0_3] : memref<2x32x384xf32, #tpu.memory_space<vmem>>, vector<2x32x288xf32>
    %5 = vector.extract_strided_slice %3 {offsets = [0, 0], sizes = [32, 1], strides = [1, 1]} : vector<32x9xf32> to vector<32x1xf32>
    %6 = vector.shape_cast %5 : vector<32x1xf32> to vector<1x32x1xf32>
    %7 = vector.broadcast %6 : vector<1x32x1xf32> to vector<2x32x288xf32>
    %8 = arith.mulf %4, %7 : vector<2x32x288xf32>
    %c0_4 = arith.constant 0 : index
    %c0_5 = arith.constant 0 : index
    %c1 = arith.constant 1 : index
    %9 = vector.load %arg1[%c0_4, %c0_5, %c1] : memref<2x32x384xf32, #tpu.memory_space<vmem>>, vector<2x32x288xf32>
    %10 = vector.extract_strided_slice %3 {offsets = [0, 1], sizes = [32, 1], strides = [1, 1]} : vector<32x9xf32> to vector<32x1xf32>
    %11 = vector.shape_cast %10 : vector<32x1xf32> to vector<1x32x1xf32>
    %12 = vector.broadcast %11 : vector<1x32x1xf32> to vector<2x32x288xf32>
    %13 = arith.mulf %9, %12 : vector<2x32x288xf32>
    %14 = arith.addf %8, %13 : vector<2x32x288xf32>
    %c0_6 = arith.constant 0 : index
    %c0_7 = arith.constant 0 : index
    %c2 = arith.constant 2 : index
    %15 = vector.load %arg1[%c0_6, %c0_7, %c2] : memref<2x32x384xf32, #tpu.memory_space<vmem>>, vector<2x32x288xf32>
    %16 = vector.extract_strided_slice %3 {offsets = [0, 2], sizes = [32, 1], strides = [1, 1]} : vector<32x9xf32> to vector<32x1xf32>
    %17 = vector.shape_cast %16 : vector<32x1xf32> to vector<1x32x1xf32>
    %18 = vector.broadcast %17 : vector<1x32x1xf32> to vector<2x32x288xf32>
    %19 = arith.mulf %15, %18 : vector<2x32x288xf32>
    %20 = arith.addf %14, %19 : vector<2x32x288xf32>
    %c0_8 = arith.constant 0 : index
    %c0_9 = arith.constant 0 : index
    %c18 = arith.constant 18 : index
    %21 = vector.load %arg1[%c0_8, %c0_9, %c18] : memref<2x32x384xf32, #tpu.memory_space<vmem>>, vector<2x32x288xf32>
    %22 = vector.extract_strided_slice %3 {offsets = [0, 3], sizes = [32, 1], strides = [1, 1]} : vector<32x9xf32> to vector<32x1xf32>
    %23 = vector.shape_cast %22 : vector<32x1xf32> to vector<1x32x1xf32>
    %24 = vector.broadcast %23 : vector<1x32x1xf32> to vector<2x32x288xf32>
    %25 = arith.mulf %21, %24 : vector<2x32x288xf32>
    %26 = arith.addf %20, %25 : vector<2x32x288xf32>
    %c0_10 = arith.constant 0 : index
    %c0_11 = arith.constant 0 : index
    %c19 = arith.constant 19 : index
    %27 = vector.load %arg1[%c0_10, %c0_11, %c19] : memref<2x32x384xf32, #tpu.memory_space<vmem>>, vector<2x32x288xf32>
    %28 = vector.extract_strided_slice %3 {offsets = [0, 4], sizes = [32, 1], strides = [1, 1]} : vector<32x9xf32> to vector<32x1xf32>
    %29 = vector.shape_cast %28 : vector<32x1xf32> to vector<1x32x1xf32>
    %30 = vector.broadcast %29 : vector<1x32x1xf32> to vector<2x32x288xf32>
    %31 = arith.mulf %27, %30 : vector<2x32x288xf32>
    %32 = arith.addf %26, %31 : vector<2x32x288xf32>
    %c0_12 = arith.constant 0 : index
    %c0_13 = arith.constant 0 : index
    %c20 = arith.constant 20 : index
    %33 = vector.load %arg1[%c0_12, %c0_13, %c20] : memref<2x32x384xf32, #tpu.memory_space<vmem>>, vector<2x32x288xf32>
    %34 = vector.extract_strided_slice %3 {offsets = [0, 5], sizes = [32, 1], strides = [1, 1]} : vector<32x9xf32> to vector<32x1xf32>
    %35 = vector.shape_cast %34 : vector<32x1xf32> to vector<1x32x1xf32>
    %36 = vector.broadcast %35 : vector<1x32x1xf32> to vector<2x32x288xf32>
    %37 = arith.mulf %33, %36 : vector<2x32x288xf32>
    %38 = arith.addf %32, %37 : vector<2x32x288xf32>
    %c0_14 = arith.constant 0 : index
    %c0_15 = arith.constant 0 : index
    %c36 = arith.constant 36 : index
    %39 = vector.load %arg1[%c0_14, %c0_15, %c36] : memref<2x32x384xf32, #tpu.memory_space<vmem>>, vector<2x32x288xf32>
    %40 = vector.extract_strided_slice %3 {offsets = [0, 6], sizes = [32, 1], strides = [1, 1]} : vector<32x9xf32> to vector<32x1xf32>
    %41 = vector.shape_cast %40 : vector<32x1xf32> to vector<1x32x1xf32>
    %42 = vector.broadcast %41 : vector<1x32x1xf32> to vector<2x32x288xf32>
    %43 = arith.mulf %39, %42 : vector<2x32x288xf32>
    %44 = arith.addf %38, %43 : vector<2x32x288xf32>
    %c0_16 = arith.constant 0 : index
    %c0_17 = arith.constant 0 : index
    %c37 = arith.constant 37 : index
    %45 = vector.load %arg1[%c0_16, %c0_17, %c37] : memref<2x32x384xf32, #tpu.memory_space<vmem>>, vector<2x32x288xf32>
    %46 = vector.extract_strided_slice %3 {offsets = [0, 7], sizes = [32, 1], strides = [1, 1]} : vector<32x9xf32> to vector<32x1xf32>
    %47 = vector.shape_cast %46 : vector<32x1xf32> to vector<1x32x1xf32>
    %48 = vector.broadcast %47 : vector<1x32x1xf32> to vector<2x32x288xf32>
    %49 = arith.mulf %45, %48 : vector<2x32x288xf32>
    %50 = arith.addf %44, %49 : vector<2x32x288xf32>
    %c0_18 = arith.constant 0 : index
    %c0_19 = arith.constant 0 : index
    %c38 = arith.constant 38 : index
    %51 = vector.load %arg1[%c0_18, %c0_19, %c38] : memref<2x32x384xf32, #tpu.memory_space<vmem>>, vector<2x32x288xf32>
    %52 = vector.extract_strided_slice %3 {offsets = [0, 8], sizes = [32, 1], strides = [1, 1]} : vector<32x9xf32> to vector<32x1xf32>
    %53 = vector.shape_cast %52 : vector<32x1xf32> to vector<1x32x1xf32>
    %54 = vector.broadcast %53 : vector<1x32x1xf32> to vector<2x32x288xf32>
    %55 = arith.mulf %51, %54 : vector<2x32x288xf32>
    %56 = arith.addf %50, %55 : vector<2x32x288xf32>
    %57 = vector.extract_strided_slice %56 {offsets = [0, 0, 0], sizes = [1, 32, 288], strides = [1, 1, 1]} : vector<2x32x288xf32> to vector<1x32x288xf32>
    %58 = vector.shape_cast %57 : vector<1x32x288xf32> to vector<32x288xf32>
    %cst = arith.constant dense<0.000000e+00> : vector<64x288xf32>
    %59 = tpu.matmul %1, %58, %cst {dimension_numbers = #tpu.dot_dimension_numbers<[1], [0], [0], [1], [0, 0, 1, 1], [], []>} : vector<64x32xf32>, vector<32x288xf32>, vector<64x288xf32> -> vector<64x288xf32>
    %60 = vector.broadcast %2 : vector<64x1xf32> to vector<64x288xf32>
    %61 = arith.addf %59, %60 : vector<64x288xf32>
    %c0_20 = arith.constant 0 : index
    %c0_21 = arith.constant 0 : index
    %c0_22 = arith.constant 0 : index
    %62 = vector.load %arg3[%c0_20, %c0_21, %c0_22] : memref<2x64x288xf32, #tpu.memory_space<vmem>>, vector<1x64x288xf32>
    %63 = vector.shape_cast %62 : vector<1x64x288xf32> to vector<64x288xf32>
    %64 = vector.shape_cast %61 : vector<64x288xf32> to vector<1x64x288xf32>
    tpu.vector_store %arg3[%c0_20, %c0_21, %c0_22], %64 {strides = array<i32>} : memref<2x64x288xf32, #tpu.memory_space<vmem>>, vector<1x64x288xf32>,
    %65 = vector.extract_strided_slice %56 {offsets = [1, 0, 0], sizes = [1, 32, 288], strides = [1, 1, 1]} : vector<2x32x288xf32> to vector<1x32x288xf32>
    %66 = vector.shape_cast %65 : vector<1x32x288xf32> to vector<32x288xf32>
    %cst_23 = arith.constant dense<0.000000e+00> : vector<64x288xf32>
    %67 = tpu.matmul %1, %66, %cst_23 {dimension_numbers = #tpu.dot_dimension_numbers<[1], [0], [0], [1], [0, 0, 1, 1], [], []>} : vector<64x32xf32>, vector<32x288xf32>, vector<64x288xf32> -> vector<64x288xf32>
    %68 = vector.broadcast %2 : vector<64x1xf32> to vector<64x288xf32>
    %69 = arith.addf %67, %68 : vector<64x288xf32>
    %c1_24 = arith.constant 1 : index
    %c0_25 = arith.constant 0 : index
    %c0_26 = arith.constant 0 : index
    %70 = vector.load %arg3[%c1_24, %c0_25, %c0_26] : memref<2x64x288xf32, #tpu.memory_space<vmem>>, vector<1x64x288xf32>
    %71 = vector.shape_cast %70 : vector<1x64x288xf32> to vector<64x288xf32>
    %72 = vector.shape_cast %69 : vector<64x288xf32> to vector<1x64x288xf32>
    tpu.vector_store %arg3[%c1_24, %c0_25, %c0_26], %72 {strides = array<i32>} : memref<2x64x288xf32, #tpu.memory_space<vmem>>, vector<1x64x288xf32>,
    return
  }
  func.func @transform_0(%arg0: i32) -> (i32, i32, i32) {
    %c0_i32 = arith.constant 0 : i32
    %c0_i32_0 = arith.constant 0 : i32
    %c0_i32_1 = arith.constant 0 : i32
    return %arg0, %c0_i32, %c0_i32_0 : i32, i32, i32
  }
  func.func @transform_1(%arg0: i32) -> (i32, i32) {
    %c0_i32 = arith.constant 0 : i32
    %c0_i32_0 = arith.constant 0 : i32
    %c0_i32_1 = arith.constant 0 : i32
    return %c0_i32, %c0_i32_0 : i32, i32
  }
  func.func @transform_2(%arg0: i32) -> (i32, i32, i32) {
    %c0_i32 = arith.constant 0 : i32
    %c0_i32_0 = arith.constant 0 : i32
    %c0_i32_1 = arith.constant 0 : i32
    return %arg0, %c0_i32, %c0_i32_0 : i32, i32, i32
  }
}

</mosaic_0001>

<llo_original>
// kernel: tpu_custom_call.1
$region0: #{tpu_custom_call.1}
  #allocation0 [shape = 'u32[]', space=smem, size = 0x4, offset = 0x4, fixed_abs, tag = 'smem constant byte address 0x4 - core index']
  #allocation1 [shape = 'u32[144,128]{1,0:T(1,128)}', space=vmem, size = 0x12000, scoped, tag = 'internal scratch']
  %s0 = inlined_call_operand.hbm [shape: f32[2,32,384], index: 0, kind: input, shape index: {}]
  %s1 = inlined_call_operand.vmem [shape: f32[64,42], index: 1, kind: input, shape index: {}]
  %s2 = inlined_call_operand.hbm [shape: f32[2,64,288], index: 2, kind: output, shape index: {}]
  %s3 = sld [smem:[#allocation0]]
  $region22: #{tpu_custom_call.1} parent=0
    _
  %s5 = ssub.s32 1, %s3
  %s6 = scalar_select 0, %s5, %s3
  $region1: #{tpu_custom_call.1} parent=0
    #allocation2 [shape = 'u8[98304]{0}', space=vmem, size = 0x18000, scoped, tag = 'input window, operand 0, single buffered']
    #allocation3 [shape = 's32[1]{0}', space=sflag, size = 0x4, scoped, tag = 'scoped memory for tpu_custom_call.1']
    #allocation4 [shape = 's32[1]{0}', space=sflag, size = 0x4, scoped, tag = 'scoped memory for tpu_custom_call.1']
    #allocation5 [shape = 'u8[196608]{0}', space=vmem, size = 0x30000, scoped, tag = 'output window, operand 0, single buffered']
    %7 = vsyncpa [#allocation3], 0
    %8 = vsyncpa [#allocation4], 0
    // Predicated region
    $region2: #{tpu_custom_call.1} parent=1 // pred_check
      _
    $region3: #{tpu_custom_call.1} parent=1 // pred_check_branch
      %10 = sbr.rel (0) target = $region5
    $region4: #{tpu_custom_call.1} parent=1 // pred_region
      %s12 = ssub.s32 3072, 3072
      %13 = vsyncadd [#allocation3], %s12
      %s14 = sshll.u32 [#allocation2], 4
      %s15 = int_to_ptr.vmem [resolvable:$true] %s14
      %20 = dma.hbm_to_vmem [thread:$0]  %s0, 3072, %s15, [#allocation3], 384, 384, 24
    $region5: #{tpu_custom_call.1} parent=1 // pred_fallthru
      _
    // Predicated region
    $region6: #{tpu_custom_call.1} parent=1 // pred_check
      _
    $region7: #{tpu_custom_call.1} parent=1 // pred_check_branch
      %22 = sbr.rel (0) target = $region9
    $region8: #{tpu_custom_call.1} parent=1 // pred_region
      _
    $region9: #{tpu_custom_call.1} parent=1 // pred_fallthru
      _
    // Predicated region
    $region10: #{tpu_custom_call.1} parent=1 // pred_check
      _
    $region11: #{tpu_custom_call.1} parent=1 // pred_check_branch
      %24 = sbr.rel (0) target = $region13
    $region12: #{tpu_custom_call.1} parent=1 // pred_region
      %25 = dma.done [#allocation3], 3072
    $region13: #{tpu_custom_call.1} parent=1 // pred_fallthru
      _
    %v26 = vld [vmem:[%s1] sm:$0xff]
    %v27 = vld [vmem:[%s1 + $0x8] sm:$0xff]
    %v28 = vld [vmem:[%s1 + $0x10] sm:$0xff]
    %v29 = vld [vmem:[%s1 + $0x18] sm:$0xff]
    %v30 = vld [vmem:[%s1 + $0x20] sm:$0xff]
    %v31 = vld [vmem:[%s1 + $0x28] sm:$0xff]
    %v32 = vld [vmem:[%s1 + $0x30] sm:$0xff]
    %v33 = vld [vmem:[%s1 + $0x38] sm:$0xff]
    %v34 = vld [vmem:[#allocation2] sm:$0xff]
    %v35 = vld [vmem:[#allocation2 + $0x8] sm:$0xff]
    %v36 = vld [vmem:[#allocation2 + $0x10] sm:$0xff]
    %v37 = vld [vmem:[#allocation2 + $0x18] sm:$0xff]
    %v38 = vld [vmem:[#allocation2 + $0x20] sm:$0xff]
    %v39 = vld [vmem:[#allocation2 + $0x28] sm:$0xff]
    %v40 = vld [vmem:[#allocation2 + $0x30] sm:$0xff]
    %v41 = vld [vmem:[#allocation2 + $0x38] sm:$0xff]
    %v42 = vld [vmem:[#allocation2 + $0x40] sm:$0xff]
    %v43 = vld [vmem:[#allocation2 + $0x48] sm:$0xff]
    %v44 = vld [vmem:[#allocation2 + $0x50] sm:$0xff]
    %v45 = vld [vmem:[#allocation2 + $0x58] sm:$0xff]
    %v46 = vld [vmem:[#allocation2 + $0x60] sm:$0xff]
    %v47 = vld [vmem:[#allocation2 + $0x68] sm:$0xff]
    %v48 = vld [vmem:[#allocation2 + $0x70] sm:$0xff]
    %v49 = vld [vmem:[#allocation2 + $0x78] sm:$0xff]
    %v50 = vld [vmem:[#allocation2 + $0x80] sm:$0xff]
    %v51 = vld [vmem:[#allocation2 + $0x88] sm:$0xff]
    %v52 = vld [vmem:[#allocation2 + $0x90] sm:$0xff]
    %v53 = vld [vmem:[#allocation2 + $0x98] sm:$0xff]
    %v54 = vld [vmem:[#allocation2 + $0xa0] sm:$0xff]
    %v55 = vld [vmem:[#allocation2 + $0xa8] sm:$0xff]
    %v56 = vld [vmem:[#allocation2 + $0xb0] sm:$0xff]
    %v57 = vld [vmem:[#allocation2 + $0xb8] sm:$0xff]
    %59 = vset.pattern.permute.xlu0 33
    %60 = vperm.xlu0 %59, %v26
    %v61 = vpop.permute.xlu0 %60
    %64 = vset.pattern.permute.xlu0 33
    %65 = vperm.xlu0 %64, %v27
    %v66 = vpop.permute.xlu0 %65
    %69 = vset.pattern.permute.xlu0 33
    %70 = vperm.xlu0 %69, %v28
    %v71 = vpop.permute.xlu0 %70
    %74 = vset.pattern.permute.xlu0 33
    %75 = vperm.xlu0 %74, %v29
    %v76 = vpop.permute.xlu0 %75
    %v78 = vmul.f32 %v34, %v61
    %v79 = vmul.f32 %v35, %v61
    %v80 = vmul.f32 %v36, %v61
    %v81 = vmul.f32 %v37, %v66
    %v82 = vmul.f32 %v38, %v66
    %v83 = vmul.f32 %v39, %v66
    %v84 = vmul.f32 %v40, %v71
    %v85 = vmul.f32 %v41, %v71
    %v86 = vmul.f32 %v42, %v71
    %v87 = vmul.f32 %v43, %v76
    %v88 = vmul.f32 %v44, %v76
    %v89 = vmul.f32 %v45, %v76
    %v90 = vmul.f32 %v46, %v61
    %v91 = vmul.f32 %v47, %v61
    %v92 = vmul.f32 %v48, %v61
    %v93 = vmul.f32 %v49, %v66
    %v94 = vmul.f32 %v50, %v66
    %v95 = vmul.f32 %v51, %v66
    %v96 = vmul.f32 %v52, %v71
    %v97 = vmul.f32 %v53, %v71
    %v98 = vmul.f32 %v54, %v71
    %v99 = vmul.f32 %v55, %v76
    %v100 = vmul.f32 %v56, %v76
    %v101 = vmul.f32 %v57, %v76
    %102 = vset.pattern.permute.xlu0 34
    %103 = vperm.xlu0 %102, %v26
    %v104 = vpop.permute.xlu0 %103
    %106 = vset.pattern.permute.xlu0 34
    %107 = vperm.xlu0 %106, %v27
    %v108 = vpop.permute.xlu0 %107
    %110 = vset.pattern.permute.xlu0 34
    %111 = vperm.xlu0 %110, %v28
    %v112 = vpop.permute.xlu0 %111
    %114 = vset.pattern.permute.xlu0 34
    %115 = vperm.xlu0 %114, %v29
    %v116 = vpop.permute.xlu0 %115
    %v118 = vmul.f32 %v34, %v104
    %v119 = vmul.f32 %v35, %v104
    %v120 = vmul.f32 %v36, %v104
    %v121 = vmul.f32 %v37, %v108
    %v122 = vmul.f32 %v38, %v108
    %v123 = vmul.f32 %v39, %v108
    %v124 = vmul.f32 %v40, %v112
    %v125 = vmul.f32 %v41, %v112
    %v126 = vmul.f32 %v42, %v112
    %v127 = vmul.f32 %v43, %v116
    %v128 = vmul.f32 %v44, %v116
    %v129 = vmul.f32 %v45, %v116
    %v130 = vmul.f32 %v46, %v104
    %v131 = vmul.f32 %v47, %v104
    %v132 = vmul.f32 %v48, %v104
    %v133 = vmul.f32 %v49, %v108
    %v134 = vmul.f32 %v50, %v108
    %v135 = vmul.f32 %v51, %v108
    %v136 = vmul.f32 %v52, %v112
    %v137 = vmul.f32 %v53, %v112
    %v138 = vmul.f32 %v54, %v112
    %v139 = vmul.f32 %v55, %v116
    %v140 = vmul.f32 %v56, %v116
    %v141 = vmul.f32 %v57, %v116
    %166 = vrot.lane.b32.xlu0 %v118, 127
    %v167 = vpop.permute.xlu0 %166
    %168 = vrot.lane.b32.xlu0 %v119, 127
    %v169 = vpop.permute.xlu0 %168
    %170 = vrot.lane.b32.xlu0 %v120, 127
    %v171 = vpop.permute.xlu0 %170
    %172 = vrot.lane.b32.xlu0 %v121, 127
    %v173 = vpop.permute.xlu0 %172
    %174 = vrot.lane.b32.xlu0 %v122, 127
    %v175 = vpop.permute.xlu0 %174
    %176 = vrot.lane.b32.xlu0 %v123, 127
    %v177 = vpop.permute.xlu0 %176
    %178 = vrot.lane.b32.xlu0 %v124, 127
    %v179 = vpop.permute.xlu0 %178
    %180 = vrot.lane.b32.xlu0 %v125, 127
    %v181 = vpop.permute.xlu0 %180
    %182 = vrot.lane.b32.xlu0 %v126, 127
    %v183 = vpop.permute.xlu0 %182
    %184 = vrot.lane.b32.xlu0 %v127, 127
    %v185 = vpop.permute.xlu0 %184
    %186 = vrot.lane.b32.xlu0 %v128, 127
    %v187 = vpop.permute.xlu0 %186
    %188 = vrot.lane.b32.xlu0 %v129, 127
    %v189 = vpop.permute.xlu0 %188
    %190 = vrot.lane.b32.xlu0 %v130, 127
    %v191 = vpop.permute.xlu0 %190
    %192 = vrot.lane.b32.xlu0 %v131, 127
    %v193 = vpop.permute.xlu0 %192
    %194 = vrot.lane.b32.xlu0 %v132, 127
    %v195 = vpop.permute.xlu0 %194
    %196 = vrot.lane.b32.xlu0 %v133, 127
    %v197 = vpop.permute.xlu0 %196
    %198 = vrot.lane.b32.xlu0 %v134, 127
    %v199 = vpop.permute.xlu0 %198
    %200 = vrot.lane.b32.xlu0 %v135, 127
    %v201 = vpop.permute.xlu0 %200
    %202 = vrot.lane.b32.xlu0 %v136, 127
    %v203 = vpop.permute.xlu0 %202
    %204 = vrot.lane.b32.xlu0 %v137, 127
    %v205 = vpop.permute.xlu0 %204
    %206 = vrot.lane.b32.xlu0 %v138, 127
    %v207 = vpop.permute.xlu0 %206
    %208 = vrot.lane.b32.xlu0 %v139, 127
    %v209 = vpop.permute.xlu0 %208
    %210 = vrot.lane.b32.xlu0 %v140, 127
    %v211 = vpop.permute.xlu0 %210
    %212 = vrot.lane.b32.xlu0 %v141, 127
    %v213 = vpop.permute.xlu0 %212
    %vm214 = vcmask 1039360
    %v215 = vsel %vm214, %v167, %v169
    %v216 = vsel %vm214, %v169, %v171
    %v217 = vsel %vm214, %v173, %v175
    %v218 = vsel %vm214, %v175, %v177
    %v219 = vsel %vm214, %v179, %v181
    %v220 = vsel %vm214, %v181, %v183
    %v221 = vsel %vm214, %v185, %v187
    %v222 = vsel %vm214, %v187, %v189
    %v223 = vsel %vm214, %v191, %v193
    %v224 = vsel %vm214, %v193, %v195
    %v225 = vsel %vm214, %v197, %v199
    %v226 = vsel %vm214, %v199, %v201
    %v227 = vsel %vm214, %v203, %v205
    %v228 = vsel %vm214, %v205, %v207
    %v229 = vsel %vm214, %v209, %v211
    %v230 = vsel %vm214, %v211, %v213
    %v255 = vadd.f32 %v78, %v215
    %v256 = vadd.f32 %v79, %v216
    %v257 = vadd.f32 %v80, %v171
    %v258 = vadd.f32 %v81, %v217
    %v259 = vadd.f32 %v82, %v218
    %v260 = vadd.f32 %v83, %v177
    %v261 = vadd.f32 %v84, %v219
    %v262 = vadd.f32 %v85, %v220
    %v263 = vadd.f32 %v86, %v183
    %v264 = vadd.f32 %v87, %v221
    %v265 = vadd.f32 %v88, %v222
    %v266 = vadd.f32 %v89, %v189
    %v267 = vadd.f32 %v90, %v223
    %v268 = vadd.f32 %v91, %v224
    %v269 = vadd.f32 %v92, %v195
    %v270 = vadd.f32 %v93, %v225
    %v271 = vadd.f32 %v94, %v226
    %v272 = vadd.f32 %v95, %v201
    %v273 = vadd.f32 %v96, %v227
    %v274 = vadd.f32 %v97, %v228
    %v275 = vadd.f32 %v98, %v207
    %v276 = vadd.f32 %v99, %v229
    %v277 = vadd.f32 %v100, %v230
    %v278 = vadd.f32 %v101, %v213
    %279 = vset.pattern.permute.xlu0 35
    %280 = vperm.xlu0 %279, %v26
    %v281 = vpop.permute.xlu0 %280
    %283 = vset.pattern.permute.xlu0 35
    %284 = vperm.xlu0 %283, %v27
    %v285 = vpop.permute.xlu0 %284
    %287 = vset.pattern.permute.xlu0 35
    %288 = vperm.xlu0 %287, %v28
    %v289 = vpop.permute.xlu0 %288
    %291 = vset.pattern.permute.xlu0 35
    %292 = vperm.xlu0 %291, %v29
    %v293 = vpop.permute.xlu0 %292
    %v295 = vmul.f32 %v34, %v281
    %v296 = vmul.f32 %v35, %v281
    %v297 = vmul.f32 %v36, %v281
    %v298 = vmul.f32 %v37, %v285
    %v299 = vmul.f32 %v38, %v285
    %v300 = vmul.f32 %v39, %v285
    %v301 = vmul.f32 %v40, %v289
    %v302 = vmul.f32 %v41, %v289
    %v303 = vmul.f32 %v42, %v289
    %v304 = vmul.f32 %v43, %v293
    %v305 = vmul.f32 %v44, %v293
    %v306 = vmul.f32 %v45, %v293
    %v307 = vmul.f32 %v46, %v281
    %v308 = vmul.f32 %v47, %v281
    %v309 = vmul.f32 %v48, %v281
    %v310 = vmul.f32 %v49, %v285
    %v311 = vmul.f32 %v50, %v285
    %v312 = vmul.f32 %v51, %v285
    %v313 = vmul.f32 %v52, %v289
    %v314 = vmul.f32 %v53, %v289
    %v315 = vmul.f32 %v54, %v289
    %v316 = vmul.f32 %v55, %v293
    %v317 = vmul.f32 %v56, %v293
    %v318 = vmul.f32 %v57, %v293
    %343 = vrot.lane.b32.xlu0 %v295, 126
    %v344 = vpop.permute.xlu0 %343
    %345 = vrot.lane.b32.xlu0 %v296, 126
    %v346 = vpop.permute.xlu0 %345
    %347 = vrot.lane.b32.xlu0 %v297, 126
    %v348 = vpop.permute.xlu0 %347
    %349 = vrot.lane.b32.xlu0 %v298, 126
    %v350 = vpop.permute.xlu0 %349
    %351 = vrot.lane.b32.xlu0 %v299, 126
    %v352 = vpop.permute.xlu0 %351
    %353 = vrot.lane.b32.xlu0 %v300, 126
    %v354 = vpop.permute.xlu0 %353
    %355 = vrot.lane.b32.xlu0 %v301, 126
    %v356 = vpop.permute.xlu0 %355
    %357 = vrot.lane.b32.xlu0 %v302, 126
    %v358 = vpop.permute.xlu0 %357
    %359 = vrot.lane.b32.xlu0 %v303, 126
    %v360 = vpop.permute.xlu0 %359
    %361 = vrot.lane.b32.xlu0 %v304, 126
    %v362 = vpop.permute.xlu0 %361
    %363 = vrot.lane.b32.xlu0 %v305, 126
    %v364 = vpop.permute.xlu0 %363
    %365 = vrot.lane.b32.xlu0 %v306, 126
    %v366 = vpop.permute.xlu0 %365
    %367 = vrot.lane.b32.xlu0 %v307, 126
    %v368 = vpop.permute.xlu0 %367
    %369 = vrot.lane.b32.xlu0 %v308, 126
    %v370 = vpop.permute.xlu0 %369
    %371 = vrot.lane.b32.xlu0 %v309, 126
    %v372 = vpop.permute.xlu0 %371
    %373 = vrot.lane.b32.xlu0 %v310, 126
    %v374 = vpop.permute.xlu0 %373
    %375 = vrot.lane.b32.xlu0 %v311, 126
    %v376 = vpop.permute.xlu0 %375
    %377 = vrot.lane.b32.xlu0 %v312, 126
    %v378 = vpop.permute.xlu0 %377
    %379 = vrot.lane.b32.xlu0 %v313, 126
    %v380 = vpop.permute.xlu0 %379
    %381 = vrot.lane.b32.xlu0 %v314, 126
    %v382 = vpop.permute.xlu0 %381
    %383 = vrot.lane.b32.xlu0 %v315, 126
    %v384 = vpop.permute.xlu0 %383
    %385 = vrot.lane.b32.xlu0 %v316, 126
    %v386 = vpop.permute.xlu0 %385
    %387 = vrot.lane.b32.xlu0 %v317, 126
    %v388 = vpop.permute.xlu0 %387
    %389 = vrot.lane.b32.xlu0 %v318, 126
    %v390 = vpop.permute.xlu0 %389
    %vm391 = vcmask 1031168
    %v392 = vsel %vm391, %v344, %v346
    %v393 = vsel %vm391, %v346, %v348
    %v394 = vsel %vm391, %v350, %v352
    %v395 = vsel %vm391, %v352, %v354
    %v396 = vsel %vm391, %v356, %v358
    %v397 = vsel %vm391, %v358, %v360
    %v398 = vsel %vm391, %v362, %v364
    %v399 = vsel %vm391, %v364, %v366
    %v400 = vsel %vm391, %v368, %v370
    %v401 = vsel %vm391, %v370, %v372
    %v402 = vsel %vm391, %v374, %v376
    %v403 = vsel %vm391, %v376, %v378
    %v404 = vsel %vm391, %v380, %v382
    %v405 = vsel %vm391, %v382, %v384
    %v406 = vsel %vm391, %v386, %v388
    %v407 = vsel %vm391, %v388, %v390
    %v432 = vadd.f32 %v255, %v392
    %v433 = vadd.f32 %v256, %v393
    %v434 = vadd.f32 %v257, %v348
    %v435 = vadd.f32 %v258, %v394
    %v436 = vadd.f32 %v259, %v395
    %v437 = vadd.f32 %v260, %v354
    %v438 = vadd.f32 %v261, %v396
    %v439 = vadd.f32 %v262, %v397
    %v440 = vadd.f32 %v263, %v360
    %v441 = vadd.f32 %v264, %v398
    %v442 = vadd.f32 %v265, %v399
    %v443 = vadd.f32 %v266, %v366
    %v444 = vadd.f32 %v267, %v400
    %v445 = vadd.f32 %v268, %v401
    %v446 = vadd.f32 %v269, %v372
    %v447 = vadd.f32 %v270, %v402
    %v448 = vadd.f32 %v271, %v403
    %v449 = vadd.f32 %v272, %v378
    %v450 = vadd.f32 %v273, %v404
    %v451 = vadd.f32 %v274, %v405
    %v452 = vadd.f32 %v275, %v384
    %v453 = vadd.f32 %v276, %v406
    %v454 = vadd.f32 %v277, %v407
    %v455 = vadd.f32 %v278, %v390
    %456 = vset.pattern.permute.xlu0 36
    %457 = vperm.xlu0 %456, %v26
    %v458 = vpop.permute.xlu0 %457
    %460 = vset.pattern.permute.xlu0 36
    %461 = vperm.xlu0 %460, %v27
    %v462 = vpop.permute.xlu0 %461
    %464 = vset.pattern.permute.xlu0 36
    %465 = vperm.xlu0 %464, %v28
    %v466 = vpop.permute.xlu0 %465
    %468 = vset.pattern.permute.xlu0 36
    %469 = vperm.xlu0 %468, %v29
    %v470 = vpop.permute.xlu0 %469
    %v472 = vmul.f32 %v34, %v458
    %v473 = vmul.f32 %v35, %v458
    %v474 = vmul.f32 %v36, %v458
    %v475 = vmul.f32 %v37, %v462
    %v476 = vmul.f32 %v38, %v462
    %v477 = vmul.f32 %v39, %v462
    %v478 = vmul.f32 %v40, %v466
    %v479 = vmul.f32 %v41, %v466
    %v480 = vmul.f32 %v42, %v466
    %v481 = vmul.f32 %v43, %v470
    %v482 = vmul.f32 %v44, %v470
    %v483 = vmul.f32 %v45, %v470
    %v484 = vmul.f32 %v46, %v458
    %v485 = vmul.f32 %v47, %v458
    %v486 = vmul.f32 %v48, %v458
    %v487 = vmul.f32 %v49, %v462
    %v488 = vmul.f32 %v50, %v462
    %v489 = vmul.f32 %v51, %v462
    %v490 = vmul.f32 %v52, %v466
    %v491 = vmul.f32 %v53, %v466
    %v492 = vmul.f32 %v54, %v466
    %v493 = vmul.f32 %v55, %v470
    %v494 = vmul.f32 %v56, %v470
    %v495 = vmul.f32 %v57, %v470
    %520 = vrot.lane.b32.xlu0 %v472, 110
    %v521 = vpop.permute.xlu0 %520
    %522 = vrot.lane.b32.xlu0 %v473, 110
    %v523 = vpop.permute.xlu0 %522
    %524 = vrot.lane.b32.xlu0 %v474, 110
    %v525 = vpop.permute.xlu0 %524
    %526 = vrot.lane.b32.xlu0 %v475, 110
    %v527 = vpop.permute.xlu0 %526
    %528 = vrot.lane.b32.xlu0 %v476, 110
    %v529 = vpop.permute.xlu0 %528
    %530 = vrot.lane.b32.xlu0 %v477, 110
    %v531 = vpop.permute.xlu0 %530
    %532 = vrot.lane.b32.xlu0 %v478, 110
    %v533 = vpop.permute.xlu0 %532
    %534 = vrot.lane.b32.xlu0 %v479, 110
    %v535 = vpop.permute.xlu0 %534
    %536 = vrot.lane.b32.xlu0 %v480, 110
    %v537 = vpop.permute.xlu0 %536
    %538 = vrot.lane.b32.xlu0 %v481, 110
    %v539 = vpop.permute.xlu0 %538
    %540 = vrot.lane.b32.xlu0 %v482, 110
    %v541 = vpop.permute.xlu0 %540
    %542 = vrot.lane.b32.xlu0 %v483, 110
    %v543 = vpop.permute.xlu0 %542
    %544 = vrot.lane.b32.xlu0 %v484, 110
    %v545 = vpop.permute.xlu0 %544
    %546 = vrot.lane.b32.xlu0 %v485, 110
    %v547 = vpop.permute.xlu0 %546
    %548 = vrot.lane.b32.xlu0 %v486, 110
    %v549 = vpop.permute.xlu0 %548
    %550 = vrot.lane.b32.xlu0 %v487, 110
    %v551 = vpop.permute.xlu0 %550
    %552 = vrot.lane.b32.xlu0 %v488, 110
    %v553 = vpop.permute.xlu0 %552
    %554 = vrot.lane.b32.xlu0 %v489, 110
    %v555 = vpop.permute.xlu0 %554
    %556 = vrot.lane.b32.xlu0 %v490, 110
    %v557 = vpop.permute.xlu0 %556
    %558 = vrot.lane.b32.xlu0 %v491, 110
    %v559 = vpop.permute.xlu0 %558
    %560 = vrot.lane.b32.xlu0 %v492, 110
    %v561 = vpop.permute.xlu0 %560
    %562 = vrot.lane.b32.xlu0 %v493, 110
    %v563 = vpop.permute.xlu0 %562
    %564 = vrot.lane.b32.xlu0 %v494, 110
    %v565 = vpop.permute.xlu0 %564
    %566 = vrot.lane.b32.xlu0 %v495, 110
    %v567 = vpop.permute.xlu0 %566
    %vm568 = vcmask 900096
    %v569 = vsel %vm568, %v521, %v523
    %v570 = vsel %vm568, %v523, %v525
    %v571 = vsel %vm568, %v527, %v529
    %v572 = vsel %vm568, %v529, %v531
    %v573 = vsel %vm568, %v533, %v535
    %v574 = vsel %vm568, %v535, %v537
    %v575 = vsel %vm568, %v539, %v541
    %v576 = vsel %vm568, %v541, %v543
    %v577 = vsel %vm568, %v545, %v547
    %v578 = vsel %vm568, %v547, %v549
    %v579 = vsel %vm568, %v551, %v553
    %v580 = vsel %vm568, %v553, %v555
    %v581 = vsel %vm568, %v557, %v559
    %v582 = vsel %vm568, %v559, %v561
    %v583 = vsel %vm568, %v563, %v565
    %v584 = vsel %vm568, %v565, %v567
    %v609 = vadd.f32 %v432, %v569
    %v610 = vadd.f32 %v433, %v570
    %v611 = vadd.f32 %v434, %v525
    %v612 = vadd.f32 %v435, %v571
    %v613 = vadd.f32 %v436, %v572
    %v614 = vadd.f32 %v437, %v531
    %v615 = vadd.f32 %v438, %v573
    %v616 = vadd.f32 %v439, %v574
    %v617 = vadd.f32 %v440, %v537
    %v618 = vadd.f32 %v441, %v575
    %v619 = vadd.f32 %v442, %v576
    %v620 = vadd.f32 %v443, %v543
    %v621 = vadd.f32 %v444, %v577
    %v622 = vadd.f32 %v445, %v578
    %v623 = vadd.f32 %v446, %v549
    %v624 = vadd.f32 %v447, %v579
    %v625 = vadd.f32 %v448, %v580
    %v626 = vadd.f32 %v449, %v555
    %v627 = vadd.f32 %v450, %v581
    %v628 = vadd.f32 %v451, %v582
    %v629 = vadd.f32 %v452, %v561
    %v630 = vadd.f32 %v453, %v583
    %v631 = vadd.f32 %v454, %v584
    %v632 = vadd.f32 %v455, %v567
    %633 = vset.pattern.permute.xlu0 37
    %634 = vperm.xlu0 %633, %v26
    %v635 = vpop.permute.xlu0 %634
    %637 = vset.pattern.permute.xlu0 37
    %638 = vperm.xlu0 %637, %v27
    %v639 = vpop.permute.xlu0 %638
    %641 = vset.pattern.permute.xlu0 37
    %642 = vperm.xlu0 %641, %v28
    %v643 = vpop.permute.xlu0 %642
    %645 = vset.pattern.permute.xlu0 37
    %646 = vperm.xlu0 %645, %v29
    %v647 = vpop.permute.xlu0 %646
    %v649 = vmul.f32 %v34, %v635
    %v650 = vmul.f32 %v35, %v635
    %v651 = vmul.f32 %v36, %v635
    %v652 = vmul.f32 %v37, %v639
    %v653 = vmul.f32 %v38, %v639
    %v654 = vmul.f32 %v39, %v639
    %v655 = vmul.f32 %v40, %v643
    %v656 = vmul.f32 %v41, %v643
    %v657 = vmul.f32 %v42, %v643
    %v658 = vmul.f32 %v43, %v647
    %v659 = vmul.f32 %v44, %v647
    %v660 = vmul.f32 %v45, %v647
    %v661 = vmul.f32 %v46, %v635
    %v662 = vmul.f32 %v47, %v635
    %v663 = vmul.f32 %v48, %v635
    %v664 = vmul.f32 %v49, %v639
    %v665 = vmul.f32 %v50, %v639
    %v666 = vmul.f32 %v51, %v639
    %v667 = vmul.f32 %v52, %v643
    %v668 = vmul.f32 %v53, %v643
    %v669 = vmul.f32 %v54, %v643
    %v670 = vmul.f32 %v55, %v647
    %v671 = vmul.f32 %v56, %v647
    %v672 = vmul.f32 %v57, %v647
    %697 = vrot.lane.b32.xlu0 %v649, 109
    %v698 = vpop.permute.xlu0 %697
    %699 = vrot.lane.b32.xlu0 %v650, 109
    %v700 = vpop.permute.xlu0 %699
    %701 = vrot.lane.b32.xlu0 %v651, 109
    %v702 = vpop.permute.xlu0 %701
    %703 = vrot.lane.b32.xlu0 %v652, 109
    %v704 = vpop.permute.xlu0 %703
    %705 = vrot.lane.b32.xlu0 %v653, 109
    %v706 = vpop.permute.xlu0 %705
    %707 = vrot.lane.b32.xlu0 %v654, 109
    %v708 = vpop.permute.xlu0 %707
    %709 = vrot.lane.b32.xlu0 %v655, 109
    %v710 = vpop.permute.xlu0 %709
    %711 = vrot.lane.b32.xlu0 %v656, 109
    %v712 = vpop.permute.xlu0 %711
    %713 = vrot.lane.b32.xlu0 %v657, 109
    %v714 = vpop.permute.xlu0 %713
    %715 = vrot.lane.b32.xlu0 %v658, 109
    %v716 = vpop.permute.xlu0 %715
    %717 = vrot.lane.b32.xlu0 %v659, 109
    %v718 = vpop.permute.xlu0 %717
    %719 = vrot.lane.b32.xlu0 %v660, 109
    %v720 = vpop.permute.xlu0 %719
    %721 = vrot.lane.b32.xlu0 %v661, 109
    %v722 = vpop.permute.xlu0 %721
    %723 = vrot.lane.b32.xlu0 %v662, 109
    %v724 = vpop.permute.xlu0 %723
    %725 = vrot.lane.b32.xlu0 %v663, 109
    %v726 = vpop.permute.xlu0 %725
    %727 = vrot.lane.b32.xlu0 %v664, 109
    %v728 = vpop.permute.xlu0 %727
    %729 = vrot.lane.b32.xlu0 %v665, 109
    %v730 = vpop.permute.xlu0 %729
    %731 = vrot.lane.b32.xlu0 %v666, 109
    %v732 = vpop.permute.xlu0 %731
    %733 = vrot.lane.b32.xlu0 %v667, 109
    %v734 = vpop.permute.xlu0 %733
    %735 = vrot.lane.b32.xlu0 %v668, 109
    %v736 = vpop.permute.xlu0 %735
    %737 = vrot.lane.b32.xlu0 %v669, 109
    %v738 = vpop.permute.xlu0 %737
    %739 = vrot.lane.b32.xlu0 %v670, 109
    %v740 = vpop.permute.xlu0 %739
    %741 = vrot.lane.b32.xlu0 %v671, 109
    %v742 = vpop.permute.xlu0 %741
    %743 = vrot.lane.b32.xlu0 %v672, 109
    %v744 = vpop.permute.xlu0 %743
    %vm745 = vcmask 891904
    %v746 = vsel %vm745, %v698, %v700
    %v747 = vsel %vm745, %v700, %v702
    %v748 = vsel %vm745, %v704, %v706
    %v749 = vsel %vm745, %v706, %v708
    %v750 = vsel %vm745, %v710, %v712
    %v751 = vsel %vm745, %v712, %v714
    %v752 = vsel %vm745, %v716, %v718
    %v753 = vsel %vm745, %v718, %v720
    %v754 = vsel %vm745, %v722, %v724
    %v755 = vsel %vm745, %v724, %v726
    %v756 = vsel %vm745, %v728, %v730
    %v757 = vsel %vm745, %v730, %v732
    %v758 = vsel %vm745, %v734, %v736
    %v759 = vsel %vm745, %v736, %v738
    %v760 = vsel %vm745, %v740, %v742
    %v761 = vsel %vm745, %v742, %v744
    %v786 = vadd.f32 %v609, %v746
    %v787 = vadd.f32 %v610, %v747
    %v788 = vadd.f32 %v611, %v702
    %v789 = vadd.f32 %v612, %v748
    %v790 = vadd.f32 %v613, %v749
    %v791 = vadd.f32 %v614, %v708
    %v792 = vadd.f32 %v615, %v750
    %v793 = vadd.f32 %v616, %v751
    %v794 = vadd.f32 %v617, %v714
    %v795 = vadd.f32 %v618, %v752
    %v796 = vadd.f32 %v619, %v753
    %v797 = vadd.f32 %v620, %v720
    %v798 = vadd.f32 %v621, %v754
    %v799 = vadd.f32 %v622, %v755
    %v800 = vadd.f32 %v623, %v726
    %v801 = vadd.f32 %v624, %v756
    %v802 = vadd.f32 %v625, %v757
    %v803 = vadd.f32 %v626, %v732
    %v804 = vadd.f32 %v627, %v758
    %v805 = vadd.f32 %v628, %v759
    %v806 = vadd.f32 %v629, %v738
    %v807 = vadd.f32 %v630, %v760
    %v808 = vadd.f32 %v631, %v761
    %v809 = vadd.f32 %v632, %v744
    %810 = vset.pattern.permute.xlu0 38
    %811 = vperm.xlu0 %810, %v26
    %v812 = vpop.permute.xlu0 %811
    %814 = vset.pattern.permute.xlu0 38
    %815 = vperm.xlu0 %814, %v27
    %v816 = vpop.permute.xlu0 %815
    %818 = vset.pattern.permute.xlu0 38
    %819 = vperm.xlu0 %818, %v28
    %v820 = vpop.permute.xlu0 %819
    %822 = vset.pattern.permute.xlu0 38
    %823 = vperm.xlu0 %822, %v29
    %v824 = vpop.permute.xlu0 %823
    %v826 = vmul.f32 %v34, %v812
    %v827 = vmul.f32 %v35, %v812
    %v828 = vmul.f32 %v36, %v812
    %v829 = vmul.f32 %v37, %v816
    %v830 = vmul.f32 %v38, %v816
    %v831 = vmul.f32 %v39, %v816
    %v832 = vmul.f32 %v40, %v820
    %v833 = vmul.f32 %v41, %v820
    %v834 = vmul.f32 %v42, %v820
    %v835 = vmul.f32 %v43, %v824
    %v836 = vmul.f32 %v44, %v824
    %v837 = vmul.f32 %v45, %v824
    %v838 = vmul.f32 %v46, %v812
    %v839 = vmul.f32 %v47, %v812
    %v840 = vmul.f32 %v48, %v812
    %v841 = vmul.f32 %v49, %v816
    %v842 = vmul.f32 %v50, %v816
    %v843 = vmul.f32 %v51, %v816
    %v844 = vmul.f32 %v52, %v820
    %v845 = vmul.f32 %v53, %v820
    %v846 = vmul.f32 %v54, %v820
    %v847 = vmul.f32 %v55, %v824
    %v848 = vmul.f32 %v56, %v824
    %v849 = vmul.f32 %v57, %v824
    %874 = vrot.lane.b32.xlu0 %v826, 108
    %v875 = vpop.permute.xlu0 %874
    %876 = vrot.lane.b32.xlu0 %v827, 108
    %v877 = vpop.permute.xlu0 %876
    %878 = vrot.lane.b32.xlu0 %v828, 108
    %v879 = vpop.permute.xlu0 %878
    %880 = vrot.lane.b32.xlu0 %v829, 108
    %v881 = vpop.permute.xlu0 %880
    %882 = vrot.lane.b32.xlu0 %v830, 108
    %v883 = vpop.permute.xlu0 %882
    %884 = vrot.lane.b32.xlu0 %v831, 108
    %v885 = vpop.permute.xlu0 %884
    %886 = vrot.lane.b32.xlu0 %v832, 108
    %v887 = vpop.permute.xlu0 %886
    %888 = vrot.lane.b32.xlu0 %v833, 108
    %v889 = vpop.permute.xlu0 %888
    %890 = vrot.lane.b32.xlu0 %v834, 108
    %v891 = vpop.permute.xlu0 %890
    %892 = vrot.lane.b32.xlu0 %v835, 108
    %v893 = vpop.permute.xlu0 %892
    %894 = vrot.lane.b32.xlu0 %v836, 108
    %v895 = vpop.permute.xlu0 %894
    %896 = vrot.lane.b32.xlu0 %v837, 108
    %v897 = vpop.permute.xlu0 %896
    %898 = vrot.lane.b32.xlu0 %v838, 108
    %v899 = vpop.permute.xlu0 %898
    %900 = vrot.lane.b32.xlu0 %v839, 108
    %v901 = vpop.permute.xlu0 %900
    %902 = vrot.lane.b32.xlu0 %v840, 108
    %v903 = vpop.permute.xlu0 %902
    %904 = vrot.lane.b32.xlu0 %v841, 108
    %v905 = vpop.permute.xlu0 %904
    %906 = vrot.lane.b32.xlu0 %v842, 108
    %v907 = vpop.permute.xlu0 %906
    %908 = vrot.lane.b32.xlu0 %v843, 108
    %v909 = vpop.permute.xlu0 %908
    %910 = vrot.lane.b32.xlu0 %v844, 108
    %v911 = vpop.permute.xlu0 %910
    %912 = vrot.lane.b32.xlu0 %v845, 108
    %v913 = vpop.permute.xlu0 %912
    %914 = vrot.lane.b32.xlu0 %v846, 108
    %v915 = vpop.permute.xlu0 %914
    %916 = vrot.lane.b32.xlu0 %v847, 108
    %v917 = vpop.permute.xlu0 %916
    %918 = vrot.lane.b32.xlu0 %v848, 108
    %v919 = vpop.permute.xlu0 %918
    %920 = vrot.lane.b32.xlu0 %v849, 108
    %v921 = vpop.permute.xlu0 %920
    %vm922 = vcmask 883712
    %v923 = vsel %vm922, %v875, %v877
    %v924 = vsel %vm922, %v877, %v879
    %v925 = vsel %vm922, %v881, %v883
    %v926 = vsel %vm922, %v883, %v885
    %v927 = vsel %vm922, %v887, %v889
    %v928 = vsel %vm922, %v889, %v891
    %v929 = vsel %vm922, %v893, %v895
    %v930 = vsel %vm922, %v895, %v897
    %v931 = vsel %vm922, %v899, %v901
    %v932 = vsel %vm922, %v901, %v903
    %v933 = vsel %vm922, %v905, %v907
    %v934 = vsel %vm922, %v907, %v909
    %v935 = vsel %vm922, %v911, %v913
    %v936 = vsel %vm922, %v913, %v915
    %v937 = vsel %vm922, %v917, %v919
    %v938 = vsel %vm922, %v919, %v921
    %v963 = vadd.f32 %v786, %v923
    %v964 = vadd.f32 %v787, %v924
    %v965 = vadd.f32 %v788, %v879
    %v966 = vadd.f32 %v789, %v925
    %v967 = vadd.f32 %v790, %v926
    %v968 = vadd.f32 %v791, %v885
    %v969 = vadd.f32 %v792, %v927
    %v970 = vadd.f32 %v793, %v928
    %v971 = vadd.f32 %v794, %v891
    %v972 = vadd.f32 %v795, %v929
    %v973 = vadd.f32 %v796, %v930
    %v974 = vadd.f32 %v797, %v897
    %v975 = vadd.f32 %v798, %v931
    %v976 = vadd.f32 %v799, %v932
    %v977 = vadd.f32 %v800, %v903
    %v978 = vadd.f32 %v801, %v933
    %v979 = vadd.f32 %v802, %v934
    %v980 = vadd.f32 %v803, %v909
    %v981 = vadd.f32 %v804, %v935
    %v982 = vadd.f32 %v805, %v936
    %v983 = vadd.f32 %v806, %v915
    %v984 = vadd.f32 %v807, %v937
    %v985 = vadd.f32 %v808, %v938
    %v986 = vadd.f32 %v809, %v921
    %987 = vset.pattern.permute.xlu0 39
    %988 = vperm.xlu0 %987, %v26
    %v989 = vpop.permute.xlu0 %988
    %991 = vset.pattern.permute.xlu0 39
    %992 = vperm.xlu0 %991, %v27
    %v993 = vpop.permute.xlu0 %992
    %995 = vset.pattern.permute.xlu0 39
    %996 = vperm.xlu0 %995, %v28
    %v997 = vpop.permute.xlu0 %996
    %999 = vset.pattern.permute.xlu0 39
    %1000 = vperm.xlu0 %999, %v29
    %v1001 = vpop.permute.xlu0 %1000
    %v1003 = vmul.f32 %v34, %v989
    %v1004 = vmul.f32 %v35, %v989
    %v1005 = vmul.f32 %v36, %v989
    %v1006 = vmul.f32 %v37, %v993
    %v1007 = vmul.f32 %v38, %v993
    %v1008 = vmul.f32 %v39, %v993
    %v1009 = vmul.f32 %v40, %v997
    %v1010 = vmul.f32 %v41, %v997
    %v1011 = vmul.f32 %v42, %v997
    %v1012 = vmul.f32 %v43, %v1001
    %v1013 = vmul.f32 %v44, %v1001
    %v1014 = vmul.f32 %v45, %v1001
    %v1015 = vmul.f32 %v46, %v989
    %v1016 = vmul.f32 %v47, %v989
    %v1017 = vmul.f32 %v48, %v989
    %v1018 = vmul.f32 %v49, %v993
    %v1019 = vmul.f32 %v50, %v993
    %v1020 = vmul.f32 %v51, %v993
    %v1021 = vmul.f32 %v52, %v997
    %v1022 = vmul.f32 %v53, %v997
    %v1023 = vmul.f32 %v54, %v997
    %v1024 = vmul.f32 %v55, %v1001
    %v1025 = vmul.f32 %v56, %v1001
    %v1026 = vmul.f32 %v57, %v1001
    %1051 = vrot.lane.b32.xlu0 %v1003, 92
    %v1052 = vpop.permute.xlu0 %1051
    %1053 = vrot.lane.b32.xlu0 %v1004, 92
    %v1054 = vpop.permute.xlu0 %1053
    %1055 = vrot.lane.b32.xlu0 %v1005, 92
    %v1056 = vpop.permute.xlu0 %1055
    %1057 = vrot.lane.b32.xlu0 %v1006, 92
    %v1058 = vpop.permute.xlu0 %1057
    %1059 = vrot.lane.b32.xlu0 %v1007, 92
    %v1060 = vpop.permute.xlu0 %1059
    %1061 = vrot.lane.b32.xlu0 %v1008, 92
    %v1062 = vpop.permute.xlu0 %1061
    %1063 = vrot.lane.b32.xlu0 %v1009, 92
    %v1064 = vpop.permute.xlu0 %1063
    %1065 = vrot.lane.b32.xlu0 %v1010, 92
    %v1066 = vpop.permute.xlu0 %1065
    %1067 = vrot.lane.b32.xlu0 %v1011, 92
    %v1068 = vpop.permute.xlu0 %1067
    %1069 = vrot.lane.b32.xlu0 %v1012, 92
    %v1070 = vpop.permute.xlu0 %1069
    %1071 = vrot.lane.b32.xlu0 %v1013, 92
    %v1072 = vpop.permute.xlu0 %1071
    %1073 = vrot.lane.b32.xlu0 %v1014, 92
    %v1074 = vpop.permute.xlu0 %1073
    %1075 = vrot.lane.b32.xlu0 %v1015, 92
    %v1076 = vpop.permute.xlu0 %1075
    %1077 = vrot.lane.b32.xlu0 %v1016, 92
    %v1078 = vpop.permute.xlu0 %1077
    %1079 = vrot.lane.b32.xlu0 %v1017, 92
    %v1080 = vpop.permute.xlu0 %1079
    %1081 = vrot.lane.b32.xlu0 %v1018, 92
    %v1082 = vpop.permute.xlu0 %1081
    %1083 = vrot.lane.b32.xlu0 %v1019, 92
    %v1084 = vpop.permute.xlu0 %1083
    %1085 = vrot.lane.b32.xlu0 %v1020, 92
    %v1086 = vpop.permute.xlu0 %1085
    %1087 = vrot.lane.b32.xlu0 %v1021, 92
    %v1088 = vpop.permute.xlu0 %1087
    %1089 = vrot.lane.b32.xlu0 %v1022, 92
    %v1090 = vpop.permute.xlu0 %1089
    %1091 = vrot.lane.b32.xlu0 %v1023, 92
    %v1092 = vpop.permute.xlu0 %1091
    %1093 = vrot.lane.b32.xlu0 %v1024, 92
    %v1094 = vpop.permute.xlu0 %1093
    %1095 = vrot.lane.b32.xlu0 %v1025, 92
    %v1096 = vpop.permute.xlu0 %1095
    %1097 = vrot.lane.b32.xlu0 %v1026, 92
    %v1098 = vpop.permute.xlu0 %1097
    %vm1099 = vcmask 752640
    %v1100 = vsel %vm1099, %v1052, %v1054
    %v1101 = vsel %vm1099, %v1054, %v1056
    %v1102 = vsel %vm1099, %v1058, %v1060
    %v1103 = vsel %vm1099, %v1060, %v1062
    %v1104 = vsel %vm1099, %v1064, %v1066
    %v1105 = vsel %vm1099, %v1066, %v1068
    %v1106 = vsel %vm1099, %v1070, %v1072
    %v1107 = vsel %vm1099, %v1072, %v1074
    %v1108 = vsel %vm1099, %v1076, %v1078
    %v1109 = vsel %vm1099, %v1078, %v1080
    %v1110 = vsel %vm1099, %v1082, %v1084
    %v1111 = vsel %vm1099, %v1084, %v1086
    %v1112 = vsel %vm1099, %v1088, %v1090
    %v1113 = vsel %vm1099, %v1090, %v1092
    %v1114 = vsel %vm1099, %v1094, %v1096
    %v1115 = vsel %vm1099, %v1096, %v1098
    %v1140 = vadd.f32 %v963, %v1100
    %v1141 = vadd.f32 %v964, %v1101
    %v1142 = vadd.f32 %v965, %v1056
    %v1143 = vadd.f32 %v966, %v1102
    %v1144 = vadd.f32 %v967, %v1103
    %v1145 = vadd.f32 %v968, %v1062
    %v1146 = vadd.f32 %v969, %v1104
    %v1147 = vadd.f32 %v970, %v1105
    %v1148 = vadd.f32 %v971, %v1068
    %v1149 = vadd.f32 %v972, %v1106
    %v1150 = vadd.f32 %v973, %v1107
    %v1151 = vadd.f32 %v974, %v1074
    %v1152 = vadd.f32 %v975, %v1108
    %v1153 = vadd.f32 %v976, %v1109
    %v1154 = vadd.f32 %v977, %v1080
    %v1155 = vadd.f32 %v978, %v1110
    %v1156 = vadd.f32 %v979, %v1111
    %v1157 = vadd.f32 %v980, %v1086
    %v1158 = vadd.f32 %v981, %v1112
    %v1159 = vadd.f32 %v982, %v1113
    %v1160 = vadd.f32 %v983, %v1092
    %v1161 = vadd.f32 %v984, %v1114
    %v1162 = vadd.f32 %v985, %v1115
    %v1163 = vadd.f32 %v986, %v1098
    %1164 = vset.pattern.permute.xlu0 40
    %1165 = vperm.xlu0 %1164, %v26
    %v1166 = vpop.permute.xlu0 %1165
    %1168 = vset.pattern.permute.xlu0 40
    %1169 = vperm.xlu0 %1168, %v27
    %v1170 = vpop.permute.xlu0 %1169
    %1172 = vset.pattern.permute.xlu0 40
    %1173 = vperm.xlu0 %1172, %v28
    %v1174 = vpop.permute.xlu0 %1173
    %1176 = vset.pattern.permute.xlu0 40
    %1177 = vperm.xlu0 %1176, %v29
    %v1178 = vpop.permute.xlu0 %1177
    %v1180 = vmul.f32 %v34, %v1166
    %v1181 = vmul.f32 %v35, %v1166
    %v1182 = vmul.f32 %v36, %v1166
    %v1183 = vmul.f32 %v37, %v1170
    %v1184 = vmul.f32 %v38, %v1170
    %v1185 = vmul.f32 %v39, %v1170
    %v1186 = vmul.f32 %v40, %v1174
    %v1187 = vmul.f32 %v41, %v1174
    %v1188 = vmul.f32 %v42, %v1174
    %v1189 = vmul.f32 %v43, %v1178
    %v1190 = vmul.f32 %v44, %v1178
    %v1191 = vmul.f32 %v45, %v1178
    %v1192 = vmul.f32 %v46, %v1166
    %v1193 = vmul.f32 %v47, %v1166
    %v1194 = vmul.f32 %v48, %v1166
    %v1195 = vmul.f32 %v49, %v1170
    %v1196 = vmul.f32 %v50, %v1170
    %v1197 = vmul.f32 %v51, %v1170
    %v1198 = vmul.f32 %v52, %v1174
    %v1199 = vmul.f32 %v53, %v1174
    %v1200 = vmul.f32 %v54, %v1174
    %v1201 = vmul.f32 %v55, %v1178
    %v1202 = vmul.f32 %v56, %v1178
    %v1203 = vmul.f32 %v57, %v1178
    %1228 = vrot.lane.b32.xlu0 %v1180, 91
    %v1229 = vpop.permute.xlu0 %1228
    %1230 = vrot.lane.b32.xlu0 %v1181, 91
    %v1231 = vpop.permute.xlu0 %1230
    %1232 = vrot.lane.b32.xlu0 %v1182, 91
    %v1233 = vpop.permute.xlu0 %1232
    %1234 = vrot.lane.b32.xlu0 %v1183, 91
    %v1235 = vpop.permute.xlu0 %1234
    %1236 = vrot.lane.b32.xlu0 %v1184, 91
    %v1237 = vpop.permute.xlu0 %1236
    %1238 = vrot.lane.b32.xlu0 %v1185, 91
    %v1239 = vpop.permute.xlu0 %1238
    %1240 = vrot.lane.b32.xlu0 %v1186, 91
    %v1241 = vpop.permute.xlu0 %1240
    %1242 = vrot.lane.b32.xlu0 %v1187, 91
    %v1243 = vpop.permute.xlu0 %1242
    %1244 = vrot.lane.b32.xlu0 %v1188, 91
    %v1245 = vpop.permute.xlu0 %1244
    %1246 = vrot.lane.b32.xlu0 %v1189, 91
    %v1247 = vpop.permute.xlu0 %1246
    %1248 = vrot.lane.b32.xlu0 %v1190, 91
    %v1249 = vpop.permute.xlu0 %1248
    %1250 = vrot.lane.b32.xlu0 %v1191, 91
    %v1251 = vpop.permute.xlu0 %1250
    %1252 = vrot.lane.b32.xlu0 %v1192, 91
    %v1253 = vpop.permute.xlu0 %1252
    %1254 = vrot.lane.b32.xlu0 %v1193, 91
    %v1255 = vpop.permute.xlu0 %1254
    %1256 = vrot.lane.b32.xlu0 %v1194, 91
    %v1257 = vpop.permute.xlu0 %1256
    %1258 = vrot.lane.b32.xlu0 %v1195, 91
    %v1259 = vpop.permute.xlu0 %1258
    %1260 = vrot.lane.b32.xlu0 %v1196, 91
    %v1261 = vpop.permute.xlu0 %1260
    %1262 = vrot.lane.b32.xlu0 %v1197, 91
    %v1263 = vpop.permute.xlu0 %1262
    %1264 = vrot.lane.b32.xlu0 %v1198, 91
    %v1265 = vpop.permute.xlu0 %1264
    %1266 = vrot.lane.b32.xlu0 %v1199, 91
    %v1267 = vpop.permute.xlu0 %1266
    %1268 = vrot.lane.b32.xlu0 %v1200, 91
    %v1269 = vpop.permute.xlu0 %1268
    %1270 = vrot.lane.b32.xlu0 %v1201, 91
    %v1271 = vpop.permute.xlu0 %1270
    %1272 = vrot.lane.b32.xlu0 %v1202, 91
    %v1273 = vpop.permute.xlu0 %1272
    %1274 = vrot.lane.b32.xlu0 %v1203, 91
    %v1275 = vpop.permute.xlu0 %1274
    %vm1276 = vcmask 744448
    %v1277 = vsel %vm1276, %v1229, %v1231
    %v1278 = vsel %vm1276, %v1231, %v1233
    %v1279 = vsel %vm1276, %v1235, %v1237
    %v1280 = vsel %vm1276, %v1237, %v1239
    %v1281 = vsel %vm1276, %v1241, %v1243
    %v1282 = vsel %vm1276, %v1243, %v1245
    %v1283 = vsel %vm1276, %v1247, %v1249
    %v1284 = vsel %vm1276, %v1249, %v1251
    %v1285 = vsel %vm1276, %v1253, %v1255
    %v1286 = vsel %vm1276, %v1255, %v1257
    %v1287 = vsel %vm1276, %v1259, %v1261
    %v1288 = vsel %vm1276, %v1261, %v1263
    %v1289 = vsel %vm1276, %v1265, %v1267
    %v1290 = vsel %vm1276, %v1267, %v1269
    %v1291 = vsel %vm1276, %v1271, %v1273
    %v1292 = vsel %vm1276, %v1273, %v1275
    %v1317 = vadd.f32 %v1140, %v1277
    %v1318 = vadd.f32 %v1141, %v1278
    %v1319 = vadd.f32 %v1142, %v1233
    %v1320 = vadd.f32 %v1143, %v1279
    %v1321 = vadd.f32 %v1144, %v1280
    %v1322 = vadd.f32 %v1145, %v1239
    %v1323 = vadd.f32 %v1146, %v1281
    %v1324 = vadd.f32 %v1147, %v1282
    %v1325 = vadd.f32 %v1148, %v1245
    %v1326 = vadd.f32 %v1149, %v1283
    %v1327 = vadd.f32 %v1150, %v1284
    %v1328 = vadd.f32 %v1151, %v1251
    %v1329 = vadd.f32 %v1152, %v1285
    %v1330 = vadd.f32 %v1153, %v1286
    %v1331 = vadd.f32 %v1154, %v1257
    %v1332 = vadd.f32 %v1155, %v1287
    %v1333 = vadd.f32 %v1156, %v1288
    %v1334 = vadd.f32 %v1157, %v1263
    %v1335 = vadd.f32 %v1158, %v1289
    %v1336 = vadd.f32 %v1159, %v1290
    %v1337 = vadd.f32 %v1160, %v1269
    %v1338 = vadd.f32 %v1161, %v1291
    %v1339 = vadd.f32 %v1162, %v1292
    %v1340 = vadd.f32 %v1163, %v1275
    %1341 = vset.pattern.permute.xlu0 41
    %1342 = vperm.xlu0 %1341, %v26
    %v1343 = vpop.permute.xlu0 %1342
    %1345 = vset.pattern.permute.xlu0 41
    %1346 = vperm.xlu0 %1345, %v27
    %v1347 = vpop.permute.xlu0 %1346
    %1349 = vset.pattern.permute.xlu0 41
    %1350 = vperm.xlu0 %1349, %v28
    %v1351 = vpop.permute.xlu0 %1350
    %1353 = vset.pattern.permute.xlu0 41
    %1354 = vperm.xlu0 %1353, %v29
    %v1355 = vpop.permute.xlu0 %1354
    %v1357 = vmul.f32 %v34, %v1343
    %v1358 = vmul.f32 %v35, %v1343
    %v1359 = vmul.f32 %v36, %v1343
    %v1360 = vmul.f32 %v37, %v1347
    %v1361 = vmul.f32 %v38, %v1347
    %v1362 = vmul.f32 %v39, %v1347
    %v1363 = vmul.f32 %v40, %v1351
    %v1364 = vmul.f32 %v41, %v1351
    %v1365 = vmul.f32 %v42, %v1351
    %v1366 = vmul.f32 %v43, %v1355
    %v1367 = vmul.f32 %v44, %v1355
    %v1368 = vmul.f32 %v45, %v1355
    %v1369 = vmul.f32 %v46, %v1343
    %v1370 = vmul.f32 %v47, %v1343
    %v1371 = vmul.f32 %v48, %v1343
    %v1372 = vmul.f32 %v49, %v1347
    %v1373 = vmul.f32 %v50, %v1347
    %v1374 = vmul.f32 %v51, %v1347
    %v1375 = vmul.f32 %v52, %v1351
    %v1376 = vmul.f32 %v53, %v1351
    %v1377 = vmul.f32 %v54, %v1351
    %v1378 = vmul.f32 %v55, %v1355
    %v1379 = vmul.f32 %v56, %v1355
    %v1380 = vmul.f32 %v57, %v1355
    %1405 = vrot.lane.b32.xlu0 %v1357, 90
    %v1406 = vpop.permute.xlu0 %1405
    %1407 = vrot.lane.b32.xlu0 %v1358, 90
    %v1408 = vpop.permute.xlu0 %1407
    %1409 = vrot.lane.b32.xlu0 %v1359, 90
    %v1410 = vpop.permute.xlu0 %1409
    %1411 = vrot.lane.b32.xlu0 %v1360, 90
    %v1412 = vpop.permute.xlu0 %1411
    %1413 = vrot.lane.b32.xlu0 %v1361, 90
    %v1414 = vpop.permute.xlu0 %1413
    %1415 = vrot.lane.b32.xlu0 %v1362, 90
    %v1416 = vpop.permute.xlu0 %1415
    %1417 = vrot.lane.b32.xlu0 %v1363, 90
    %v1418 = vpop.permute.xlu0 %1417
    %1419 = vrot.lane.b32.xlu0 %v1364, 90
    %v1420 = vpop.permute.xlu0 %1419
    %1421 = vrot.lane.b32.xlu0 %v1365, 90
    %v1422 = vpop.permute.xlu0 %1421
    %1423 = vrot.lane.b32.xlu0 %v1366, 90
    %v1424 = vpop.permute.xlu0 %1423
    %1425 = vrot.lane.b32.xlu0 %v1367, 90
    %v1426 = vpop.permute.xlu0 %1425
    %1427 = vrot.lane.b32.xlu0 %v1368, 90
    %v1428 = vpop.permute.xlu0 %1427
    %1429 = vrot.lane.b32.xlu0 %v1369, 90
    %v1430 = vpop.permute.xlu0 %1429
    %1431 = vrot.lane.b32.xlu0 %v1370, 90
    %v1432 = vpop.permute.xlu0 %1431
    %1433 = vrot.lane.b32.xlu0 %v1371, 90
    %v1434 = vpop.permute.xlu0 %1433
    %1435 = vrot.lane.b32.xlu0 %v1372, 90
    %v1436 = vpop.permute.xlu0 %1435
    %1437 = vrot.lane.b32.xlu0 %v1373, 90
    %v1438 = vpop.permute.xlu0 %1437
    %1439 = vrot.lane.b32.xlu0 %v1374, 90
    %v1440 = vpop.permute.xlu0 %1439
    %1441 = vrot.lane.b32.xlu0 %v1375, 90
    %v1442 = vpop.permute.xlu0 %1441
    %1443 = vrot.lane.b32.xlu0 %v1376, 90
    %v1444 = vpop.permute.xlu0 %1443
    %1445 = vrot.lane.b32.xlu0 %v1377, 90
    %v1446 = vpop.permute.xlu0 %1445
    %1447 = vrot.lane.b32.xlu0 %v1378, 90
    %v1448 = vpop.permute.xlu0 %1447
    %1449 = vrot.lane.b32.xlu0 %v1379, 90
    %v1450 = vpop.permute.xlu0 %1449
    %1451 = vrot.lane.b32.xlu0 %v1380, 90
    %v1452 = vpop.permute.xlu0 %1451
    %vm1453 = vcmask 736256
    %v1454 = vsel %vm1453, %v1406, %v1408
    %v1455 = vsel %vm1453, %v1408, %v1410
    %v1456 = vsel %vm1453, %v1412, %v1414
    %v1457 = vsel %vm1453, %v1414, %v1416
    %v1458 = vsel %vm1453, %v1418, %v1420
    %v1459 = vsel %vm1453, %v1420, %v1422
    %v1460 = vsel %vm1453, %v1424, %v1426
    %v1461 = vsel %vm1453, %v1426, %v1428
    %v1462 = vsel %vm1453, %v1430, %v1432
    %v1463 = vsel %vm1453, %v1432, %v1434
    %v1464 = vsel %vm1453, %v1436, %v1438
    %v1465 = vsel %vm1453, %v1438, %v1440
    %v1466 = vsel %vm1453, %v1442, %v1444
    %v1467 = vsel %vm1453, %v1444, %v1446
    %v1468 = vsel %vm1453, %v1448, %v1450
    %v1469 = vsel %vm1453, %v1450, %v1452
    %v1494 = vadd.f32 %v1317, %v1454
    %v1495 = vadd.f32 %v1318, %v1455
    %v1496 = vadd.f32 %v1319, %v1410
    %v1497 = vadd.f32 %v1320, %v1456
    %v1498 = vadd.f32 %v1321, %v1457
    %v1499 = vadd.f32 %v1322, %v1416
    %v1500 = vadd.f32 %v1323, %v1458
    %v1501 = vadd.f32 %v1324, %v1459
    %v1502 = vadd.f32 %v1325, %v1422
    %v1503 = vadd.f32 %v1326, %v1460
    %v1504 = vadd.f32 %v1327, %v1461
    %v1505 = vadd.f32 %v1328, %v1428
    %v1506 = vadd.f32 %v1329, %v1462
    %v1507 = vadd.f32 %v1330, %v1463
    %v1508 = vadd.f32 %v1331, %v1434
    %v1509 = vadd.f32 %v1332, %v1464
    %v1510 = vadd.f32 %v1333, %v1465
    %v1511 = vadd.f32 %v1334, %v1440
    %v1512 = vadd.f32 %v1335, %v1466
    %v1513 = vadd.f32 %v1336, %v1467
    %v1514 = vadd.f32 %v1337, %v1446
    %v1515 = vadd.f32 %v1338, %v1468
    %v1516 = vadd.f32 %v1339, %v1469
    %v1517 = vadd.f32 %v1340, %v1452
    %1518 = vset.pattern.permute.xlu0 32
    %1519 = vperm.xlu0 %1518, %v26
    %v1520 = vpop.permute.xlu0 %1519
    %1522 = vset.pattern.permute.xlu0 32
    %1523 = vperm.xlu0 %1522, %v27
    %v1524 = vpop.permute.xlu0 %1523
    %1526 = vset.pattern.permute.xlu0 32
    %1527 = vperm.xlu0 %1526, %v28
    %v1528 = vpop.permute.xlu0 %1527
    %1530 = vset.pattern.permute.xlu0 32
    %1531 = vperm.xlu0 %1530, %v29
    %v1532 = vpop.permute.xlu0 %1531
    %1535 = vset.pattern.permute.xlu0 32
    %1536 = vperm.xlu0 %1535, %v30
    %v1537 = vpop.permute.xlu0 %1536
    %1540 = vset.pattern.permute.xlu0 32
    %1541 = vperm.xlu0 %1540, %v31
    %v1542 = vpop.permute.xlu0 %1541
    %1545 = vset.pattern.permute.xlu0 32
    %1546 = vperm.xlu0 %1545, %v32
    %v1547 = vpop.permute.xlu0 %1546
    %1550 = vset.pattern.permute.xlu0 32
    %1551 = vperm.xlu0 %1550, %v33
    %v1552 = vpop.permute.xlu0 %1551
    %vm1554 = vcmask 261120
    %v1555 = vsel %vm1554, %v26, 0
    %v1557 = vsel %vm1554, %v27, 0
    %v1559 = vsel %vm1554, %v28, 0
    %v1561 = vsel %vm1554, %v29, 0
    %v1563 = vsel %vm1554, %v30, 0
    %v1565 = vsel %vm1554, %v31, 0
    %v1567 = vsel %vm1554, %v32, 0
    %v1569 = vsel %vm1554, %v33, 0
    %1571 = vmatprep.subr.mxu0 0.0
    %1572 = vmatpush1.msra.mxu0 0.0
    %1573 = vmatprep.subr.mxu0 0.0
    %1574 = vmatpush1.msra.mxu0 0.0
    %1575 = vmatprep.subr.mxu0 0.0
    %1576 = vmatpush1.msra.mxu0 0.0
    %1577 = vmatprep.subr.mxu0 0.0
    %1578 = vmatpush1.msra.mxu0 0.0
    %1579 = vmatprep.subr.mxu0 0.0
    %1580 = vmatpush1.msra.mxu0 0.0
    %1581 = vmatprep.subr.mxu0 0.0
    %1582 = vmatpush1.msra.mxu0 0.0
    %1583 = vmatprep.subr.mxu0 0.0
    %1584 = vmatpush1.msra.mxu0 0.0
    %1585 = vmatprep.subr.mxu0 0.0
    %1586 = vmatpush1.msra.mxu0 0.0
    %1587 = vmatprep.subr.mxu0 0.0
    %1588 = vmatpush1.msra.mxu0 0.0
    %1589 = vmatprep.subr.mxu0 0.0
    %1590 = vmatpush1.msra.mxu0 0.0
    %1591 = vmatprep.subr.mxu0 0.0
    %1592 = vmatpush1.msra.mxu0 0.0
    %1593 = vmatprep.subr.mxu0 0.0
    %1594 = vmatpush1.msra.mxu0 0.0
    %1595 = vmatprep.subr.mxu0 %v1504
    %1596 = vmatpush1.msra.mxu0 %v1503
    %1597 = vmatprep.subr.mxu0 %v1501
    %1598 = vmatpush1.msra.mxu0 %v1500
    %1599 = vmatprep.subr.mxu0 %v1498
    %1600 = vmatpush1.msra.mxu0 %v1497
    %1601 = vmatprep.subr.mxu0 %v1495
    %1602 = vmatpush1.msra.mxu0 %v1494
    %1603 = vmatprep.subr.mxu0 0.0
    %1604 = vmatpush2.msra.mxu0 0.0
    %1605 = vmatprep.subr.mxu0 0.0
    %1606 = vmatpush2.msra.mxu0 0.0
    %1607 = vmatprep.subr.mxu0 0.0
    %1608 = vmatpush2.msra.mxu0 0.0
    %1609 = vmatprep.subr.mxu0 0.0
    %1610 = vmatpush2.msra.mxu0 0.0
    %1611 = vmatprep.subr.mxu0 0.0
    %1612 = vmatpush2.msra.mxu0 0.0
    %1613 = vmatprep.subr.mxu0 0.0
    %1614 = vmatpush2.msra.mxu0 0.0
    %1615 = vmatprep.subr.mxu0 0.0
    %1616 = vmatpush2.msra.mxu0 0.0
    %1617 = vmatprep.subr.mxu0 0.0
    %1618 = vmatpush2.msra.mxu0 0.0
    %1619 = vmatprep.subr.mxu0 0.0
    %1620 = vmatpush2.msra.mxu0 0.0
    %1621 = vmatprep.subr.mxu0 0.0
    %1622 = vmatpush2.msra.mxu0 0.0
    %1623 = vmatprep.subr.mxu0 0.0
    %1624 = vmatpush2.msra.mxu0 0.0
    %1625 = vmatprep.subr.mxu0 0.0
    %1626 = vmatpush2.msra.mxu0 0.0
    %1627 = vmatprep.subr.mxu0 0.0
    %1628 = vmatpush2.msra.mxu0 0.0
    %1629 = vmatprep.subr.mxu0 0.0
    %1630 = vmatpush2.msra.mxu0 0.0
    %1631 = vmatprep.subr.mxu0 0.0
    %1632 = vmatpush2.msra.mxu0 0.0
    %1633 = vmatprep.subr.mxu0 0.0
    %1634 = vmatpush2.msra.mxu0 0.0
    %1635 = vmatprep.mubr.f32.mxu0 0.0
    %1636 = vmatmul.mubr.f32.gmra.mxu0 %v1555
    %v1637 = vpop.f32.mrf.mxu0
    %v1638 = vadd.f32 %v1520, %v1637
    %v1639 = vpop.f32.mrf.mxu0
    %v1640 = vadd.f32 %v1520, %v1639
    %1641 = vmatprep.mubr.f32.mxu0 0.0
    %1642 = vmatmul.mubr.f32.gmra.mxu0 %v1557
    %v1643 = vpop.f32.mrf.mxu0
    %v1644 = vadd.f32 %v1524, %v1643
    %v1645 = vpop.f32.mrf.mxu0
    %v1646 = vadd.f32 %v1524, %v1645
    %1647 = vmatprep.mubr.f32.mxu0 0.0
    %1648 = vmatmul.mubr.f32.gmra.mxu0 %v1559
    %v1649 = vpop.f32.mrf.mxu0
    %v1650 = vadd.f32 %v1528, %v1649
    %v1651 = vpop.f32.mrf.mxu0
    %v1652 = vadd.f32 %v1528, %v1651
    %1653 = vmatprep.mubr.f32.mxu0 0.0
    %1654 = vmatmul.mubr.f32.gmra.mxu0 %v1561
    %v1655 = vpop.f32.mrf.mxu0
    %v1656 = vadd.f32 %v1532, %v1655
    %v1657 = vpop.f32.mrf.mxu0
    %v1658 = vadd.f32 %v1532, %v1657
    %1659 = vmatprep.mubr.f32.mxu0 0.0
    %1660 = vmatmul.mubr.f32.gmra.mxu0 %v1563
    %v1661 = vpop.f32.mrf.mxu0
    %v1662 = vadd.f32 %v1537, %v1661
    %v1663 = vpop.f32.mrf.mxu0
    %v1664 = vadd.f32 %v1537, %v1663
    %1665 = vmatprep.mubr.f32.mxu0 0.0
    %1666 = vmatmul.mubr.f32.gmra.mxu0 %v1565
    %v1667 = vpop.f32.mrf.mxu0
    %v1668 = vadd.f32 %v1542, %v1667
    %v1669 = vpop.f32.mrf.mxu0
    %v1670 = vadd.f32 %v1542, %v1669
    %1671 = vmatprep.mubr.f32.mxu0 0.0
    %1672 = vmatmul.mubr.f32.gmra.mxu0 %v1567
    %v1673 = vpop.f32.mrf.mxu0
    %v1674 = vadd.f32 %v1547, %v1673
    %v1675 = vpop.f32.mrf.mxu0
    %v1676 = vadd.f32 %v1547, %v1675
    %1677 = vmatprep.mubr.f32.mxu0 0.0
    %1678 = vmatmul.mubr.f32.gmra.mxu0 %v1569
    %v1679 = vpop.f32.mrf.mxu0
    %v1680 = vadd.f32 %v1552, %v1679
    %v1681 = vpop.f32.mrf.mxu0
    %v1682 = vadd.f32 %v1552, %v1681
    %1683 = vdwg.mxu0
    %1684 = vmatprep.subr.mxu0 0.0
    %1685 = vmatpush1.msra.mxu0 0.0
    %1686 = vmatprep.subr.mxu0 0.0
    %1687 = vmatpush1.msra.mxu0 0.0
    %1688 = vmatprep.subr.mxu0 0.0
    %1689 = vmatpush1.msra.mxu0 0.0
    %1690 = vmatprep.subr.mxu0 0.0
    %1691 = vmatpush1.msra.mxu0 0.0
    %1692 = vmatprep.subr.mxu0 0.0
    %1693 = vmatpush1.msra.mxu0 0.0
    %1694 = vmatprep.subr.mxu0 0.0
    %1695 = vmatpush1.msra.mxu0 0.0
    %1696 = vmatprep.subr.mxu0 0.0
    %1697 = vmatpush1.msra.mxu0 0.0
    %1698 = vmatprep.subr.mxu0 0.0
    %1699 = vmatpush1.msra.mxu0 0.0
    %1700 = vmatprep.subr.mxu0 0.0
    %1701 = vmatpush1.msra.mxu0 0.0
    %1702 = vmatprep.subr.mxu0 0.0
    %1703 = vmatpush1.msra.mxu0 0.0
    %1704 = vmatprep.subr.mxu0 0.0
    %1705 = vmatpush1.msra.mxu0 0.0
    %1706 = vmatprep.subr.mxu0 0.0
    %1707 = vmatpush1.msra.mxu0 0.0
    %1708 = vmatprep.subr.mxu0 0.0
    %1709 = vmatpush1.msra.mxu0 %v1505
    %1710 = vmatprep.subr.mxu0 0.0
    %1711 = vmatpush1.msra.mxu0 %v1502
    %1712 = vmatprep.subr.mxu0 0.0
    %1713 = vmatpush1.msra.mxu0 %v1499
    %1714 = vmatprep.subr.mxu0 0.0
    %1715 = vmatpush1.msra.mxu0 %v1496
    %1716 = vmatprep.subr.mxu0 0.0
    %1717 = vmatpush2.msra.mxu0 0.0
    %1718 = vmatprep.subr.mxu0 0.0
    %1719 = vmatpush2.msra.mxu0 0.0
    %1720 = vmatprep.subr.mxu0 0.0
    %1721 = vmatpush2.msra.mxu0 0.0
    %1722 = vmatprep.subr.mxu0 0.0
    %1723 = vmatpush2.msra.mxu0 0.0
    %1724 = vmatprep.subr.mxu0 0.0
    %1725 = vmatpush2.msra.mxu0 0.0
    %1726 = vmatprep.subr.mxu0 0.0
    %1727 = vmatpush2.msra.mxu0 0.0
    %1728 = vmatprep.subr.mxu0 0.0
    %1729 = vmatpush2.msra.mxu0 0.0
    %1730 = vmatprep.subr.mxu0 0.0
    %1731 = vmatpush2.msra.mxu0 0.0
    %1732 = vmatprep.subr.mxu0 0.0
    %1733 = vmatpush2.msra.mxu0 0.0
    %1734 = vmatprep.subr.mxu0 0.0
    %1735 = vmatpush2.msra.mxu0 0.0
    %1736 = vmatprep.subr.mxu0 0.0
    %1737 = vmatpush2.msra.mxu0 0.0
    %1738 = vmatprep.subr.mxu0 0.0
    %1739 = vmatpush2.msra.mxu0 0.0
    %1740 = vmatprep.subr.mxu0 0.0
    %1741 = vmatpush2.msra.mxu0 0.0
    %1742 = vmatprep.subr.mxu0 0.0
    %1743 = vmatpush2.msra.mxu0 0.0
    %1744 = vmatprep.subr.mxu0 0.0
    %1745 = vmatpush2.msra.mxu0 0.0
    %1746 = vmatprep.subr.mxu0 0.0
    %1747 = vmatpush2.msra.mxu0 0.0
    %1748 = vmatprep.mubr.f32.mxu0 0.0
    %1749 = vmatmul.mubr.f32.gmra.mxu0 %v1555
    %v1750 = vpop.f32.mrf.mxu0
    %v1751 = vadd.f32 %v1520, %v1750
    %v1752 = vpop.f32.mrf.mxu0
    %1753 = vmatprep.mubr.f32.mxu0 0.0
    %1754 = vmatmul.mubr.f32.gmra.mxu0 %v1557
    %v1755 = vpop.f32.mrf.mxu0
    %v1756 = vadd.f32 %v1524, %v1755
    %v1757 = vpop.f32.mrf.mxu0
    %1758 = vmatprep.mubr.f32.mxu0 0.0
    %1759 = vmatmul.mubr.f32.gmra.mxu0 %v1559
    %v1760 = vpop.f32.mrf.mxu0
    %v1761 = vadd.f32 %v1528, %v1760
    %v1762 = vpop.f32.mrf.mxu0
    %1763 = vmatprep.mubr.f32.mxu0 0.0
    %1764 = vmatmul.mubr.f32.gmra.mxu0 %v1561
    %v1765 = vpop.f32.mrf.mxu0
    %v1766 = vadd.f32 %v1532, %v1765
    %v1767 = vpop.f32.mrf.mxu0
    %1768 = vmatprep.mubr.f32.mxu0 0.0
    %1769 = vmatmul.mubr.f32.gmra.mxu0 %v1563
    %v1770 = vpop.f32.mrf.mxu0
    %v1771 = vadd.f32 %v1537, %v1770
    %v1772 = vpop.f32.mrf.mxu0
    %1773 = vmatprep.mubr.f32.mxu0 0.0
    %1774 = vmatmul.mubr.f32.gmra.mxu0 %v1565
    %v1775 = vpop.f32.mrf.mxu0
    %v1776 = vadd.f32 %v1542, %v1775
    %v1777 = vpop.f32.mrf.mxu0
    %1778 = vmatprep.mubr.f32.mxu0 0.0
    %1779 = vmatmul.mubr.f32.gmra.mxu0 %v1567
    %v1780 = vpop.f32.mrf.mxu0
    %v1781 = vadd.f32 %v1547, %v1780
    %v1782 = vpop.f32.mrf.mxu0
    %1783 = vmatprep.mubr.f32.mxu0 0.0
    %1784 = vmatmul.mubr.f32.gmra.mxu0 %v1569
    %v1785 = vpop.f32.mrf.mxu0
    %v1786 = vadd.f32 %v1552, %v1785
    %v1787 = vpop.f32.mrf.mxu0
    %1788 = vdwg.mxu0
    %1789 = vst [vmem:[#allocation5] sm:$0xff] %v1638
    %1790 = vst [vmem:[#allocation5 + $0x8] sm:$0xff] %v1640
    %1791 = vst.msk [vmem:[#allocation5 + $0x10] sm:$0xff] %vm1554, %v1751
    %1792 = vst [vmem:[#allocation5 + $0x18] sm:$0xff] %v1644
    %1793 = vst [vmem:[#allocation5 + $0x20] sm:$0xff] %v1646
    %1794 = vst.msk [vmem:[#allocation5 + $0x28] sm:$0xff] %vm1554, %v1756
    %1795 = vst [vmem:[#allocation5 + $0x30] sm:$0xff] %v1650
    %1796 = vst [vmem:[#allocation5 + $0x38] sm:$0xff] %v1652
    %1797 = vst.msk [vmem:[#allocation5 + $0x40] sm:$0xff] %vm1554, %v1761
    %1798 = vst [vmem:[#allocation5 + $0x48] sm:$0xff] %v1656
    %1799 = vst [vmem:[#allocation5 + $0x50] sm:$0xff] %v1658
    %1800 = vst.msk [vmem:[#allocation5 + $0x58] sm:$0xff] %vm1554, %v1766
    %1801 = vst [vmem:[#allocation5 + $0x60] sm:$0xff] %v1662
    %1802 = vst [vmem:[#allocation5 + $0x68] sm:$0xff] %v1664
    %1803 = vst.msk [vmem:[#allocation5 + $0x70] sm:$0xff] %vm1554, %v1771
    %1804 = vst [vmem:[#allocation5 + $0x78] sm:$0xff] %v1668
    %1805 = vst [vmem:[#allocation5 + $0x80] sm:$0xff] %v1670
    %1806 = vst.msk [vmem:[#allocation5 + $0x88] sm:$0xff] %vm1554, %v1776
    %1807 = vst [vmem:[#allocation5 + $0x90] sm:$0xff] %v1674
    %1808 = vst [vmem:[#allocation5 + $0x98] sm:$0xff] %v1676
    %1809 = vst.msk [vmem:[#allocation5 + $0xa0] sm:$0xff] %vm1554, %v1781
    %1810 = vst [vmem:[#allocation5 + $0xa8] sm:$0xff] %v1680
    %1811 = vst [vmem:[#allocation5 + $0xb0] sm:$0xff] %v1682
    %1812 = vst.msk [vmem:[#allocation5 + $0xb8] sm:$0xff] %vm1554, %v1786
    %1813 = vmatprep.subr.mxu0 0.0
    %1814 = vmatpush1.msra.mxu0 0.0
    %1815 = vmatprep.subr.mxu0 0.0
    %1816 = vmatpush1.msra.mxu0 0.0
    %1817 = vmatprep.subr.mxu0 0.0
    %1818 = vmatpush1.msra.mxu0 0.0
    %1819 = vmatprep.subr.mxu0 0.0
    %1820 = vmatpush1.msra.mxu0 0.0
    %1821 = vmatprep.subr.mxu0 0.0
    %1822 = vmatpush1.msra.mxu0 0.0
    %1823 = vmatprep.subr.mxu0 0.0
    %1824 = vmatpush1.msra.mxu0 0.0
    %1825 = vmatprep.subr.mxu0 0.0
    %1826 = vmatpush1.msra.mxu0 0.0
    %1827 = vmatprep.subr.mxu0 0.0
    %1828 = vmatpush1.msra.mxu0 0.0
    %1829 = vmatprep.subr.mxu0 0.0
    %1830 = vmatpush1.msra.mxu0 0.0
    %1831 = vmatprep.subr.mxu0 0.0
    %1832 = vmatpush1.msra.mxu0 0.0
    %1833 = vmatprep.subr.mxu0 0.0
    %1834 = vmatpush1.msra.mxu0 0.0
    %1835 = vmatprep.subr.mxu0 0.0
    %1836 = vmatpush1.msra.mxu0 0.0
    %1837 = vmatprep.subr.mxu0 %v1516
    %1838 = vmatpush1.msra.mxu0 %v1515
    %1839 = vmatprep.subr.mxu0 %v1513
    %1840 = vmatpush1.msra.mxu0 %v1512
    %1841 = vmatprep.subr.mxu0 %v1510
    %1842 = vmatpush1.msra.mxu0 %v1509
    %1843 = vmatprep.subr.mxu0 %v1507
    %1844 = vmatpush1.msra.mxu0 %v1506
    %1845 = vmatprep.subr.mxu0 0.0
    %1846 = vmatpush2.msra.mxu0 0.0
    %1847 = vmatprep.subr.mxu0 0.0
    %1848 = vmatpush2.msra.mxu0 0.0
    %1849 = vmatprep.subr.mxu0 0.0
    %1850 = vmatpush2.msra.mxu0 0.0
    %1851 = vmatprep.subr.mxu0 0.0
    %1852 = vmatpush2.msra.mxu0 0.0
    %1853 = vmatprep.subr.mxu0 0.0
    %1854 = vmatpush2.msra.mxu0 0.0
    %1855 = vmatprep.subr.mxu0 0.0
    %1856 = vmatpush2.msra.mxu0 0.0
    %1857 = vmatprep.subr.mxu0 0.0
    %1858 = vmatpush2.msra.mxu0 0.0
    %1859 = vmatprep.subr.mxu0 0.0
    %1860 = vmatpush2.msra.mxu0 0.0
    %1861 = vmatprep.subr.mxu0 0.0
    %1862 = vmatpush2.msra.mxu0 0.0
    %1863 = vmatprep.subr.mxu0 0.0
    %1864 = vmatpush2.msra.mxu0 0.0
    %1865 = vmatprep.subr.mxu0 0.0
    %1866 = vmatpush2.msra.mxu0 0.0
    %1867 = vmatprep.subr.mxu0 0.0
    %1868 = vmatpush2.msra.mxu0 0.0
    %1869 = vmatprep.subr.mxu0 0.0
    %1870 = vmatpush2.msra.mxu0 0.0
    %1871 = vmatprep.subr.mxu0 0.0
    %1872 = vmatpush2.msra.mxu0 0.0
    %1873 = vmatprep.subr.mxu0 0.0
    %1874 = vmatpush2.msra.mxu0 0.0
    %1875 = vmatprep.subr.mxu0 0.0
    %1876 = vmatpush2.msra.mxu0 0.0
    %1877 = vmatprep.mubr.f32.mxu0 0.0
    %1878 = vmatmul.mubr.f32.gmra.mxu0 %v1555
    %v1879 = vpop.f32.mrf.mxu0
    %v1880 = vadd.f32 %v1520, %v1879
    %v1881 = vpop.f32.mrf.mxu0
    %v1882 = vadd.f32 %v1520, %v1881
    %1883 = vmatprep.mubr.f32.mxu0 0.0
    %1884 = vmatmul.mubr.f32.gmra.mxu0 %v1557
    %v1885 = vpop.f32.mrf.mxu0
    %v1886 = vadd.f32 %v1524, %v1885
    %v1887 = vpop.f32.mrf.mxu0
    %v1888 = vadd.f32 %v1524, %v1887
    %1889 = vmatprep.mubr.f32.mxu0 0.0
    %1890 = vmatmul.mubr.f32.gmra.mxu0 %v1559
    %v1891 = vpop.f32.mrf.mxu0
    %v1892 = vadd.f32 %v1528, %v1891
    %v1893 = vpop.f32.mrf.mxu0
    %v1894 = vadd.f32 %v1528, %v1893
    %1895 = vmatprep.mubr.f32.mxu0 0.0
    %1896 = vmatmul.mubr.f32.gmra.mxu0 %v1561
    %v1897 = vpop.f32.mrf.mxu0
    %v1898 = vadd.f32 %v1532, %v1897
    %v1899 = vpop.f32.mrf.mxu0
    %v1900 = vadd.f32 %v1532, %v1899
    %1901 = vmatprep.mubr.f32.mxu0 0.0
    %1902 = vmatmul.mubr.f32.gmra.mxu0 %v1563
    %v1903 = vpop.f32.mrf.mxu0
    %v1904 = vadd.f32 %v1537, %v1903
    %v1905 = vpop.f32.mrf.mxu0
    %v1906 = vadd.f32 %v1537, %v1905
    %1907 = vmatprep.mubr.f32.mxu0 0.0
    %1908 = vmatmul.mubr.f32.gmra.mxu0 %v1565
    %v1909 = vpop.f32.mrf.mxu0
    %v1910 = vadd.f32 %v1542, %v1909
    %v1911 = vpop.f32.mrf.mxu0
    %v1912 = vadd.f32 %v1542, %v1911
    %1913 = vmatprep.mubr.f32.mxu0 0.0
    %1914 = vmatmul.mubr.f32.gmra.mxu0 %v1567
    %v1915 = vpop.f32.mrf.mxu0
    %v1916 = vadd.f32 %v1547, %v1915
    %v1917 = vpop.f32.mrf.mxu0
    %v1918 = vadd.f32 %v1547, %v1917
    %1919 = vmatprep.mubr.f32.mxu0 0.0
    %1920 = vmatmul.mubr.f32.gmra.mxu0 %v1569
    %v1921 = vpop.f32.mrf.mxu0
    %v1922 = vadd.f32 %v1552, %v1921
    %v1923 = vpop.f32.mrf.mxu0
    %v1924 = vadd.f32 %v1552, %v1923
    %1925 = vdwg.mxu0
    %1926 = vmatprep.subr.mxu0 0.0
    %1927 = vmatpush1.msra.mxu0 0.0
    %1928 = vmatprep.subr.mxu0 0.0
    %1929 = vmatpush1.msra.mxu0 0.0
    %1930 = vmatprep.subr.mxu0 0.0
    %1931 = vmatpush1.msra.mxu0 0.0
    %1932 = vmatprep.subr.mxu0 0.0
    %1933 = vmatpush1.msra.mxu0 0.0
    %1934 = vmatprep.subr.mxu0 0.0
    %1935 = vmatpush1.msra.mxu0 0.0
    %1936 = vmatprep.subr.mxu0 0.0
    %1937 = vmatpush1.msra.mxu0 0.0
    %1938 = vmatprep.subr.mxu0 0.0
    %1939 = vmatpush1.msra.mxu0 0.0
    %1940 = vmatprep.subr.mxu0 0.0
    %1941 = vmatpush1.msra.mxu0 0.0
    %1942 = vmatprep.subr.mxu0 0.0
    %1943 = vmatpush1.msra.mxu0 0.0
    %1944 = vmatprep.subr.mxu0 0.0
    %1945 = vmatpush1.msra.mxu0 0.0
    %1946 = vmatprep.subr.mxu0 0.0
    %1947 = vmatpush1.msra.mxu0 0.0
    %1948 = vmatprep.subr.mxu0 0.0
    %1949 = vmatpush1.msra.mxu0 0.0
    %1950 = vmatprep.subr.mxu0 0.0
    %1951 = vmatpush1.msra.mxu0 %v1517
    %1952 = vmatprep.subr.mxu0 0.0
    %1953 = vmatpush1.msra.mxu0 %v1514
    %1954 = vmatprep.subr.mxu0 0.0
    %1955 = vmatpush1.msra.mxu0 %v1511
    %1956 = vmatprep.subr.mxu0 0.0
    %1957 = vmatpush1.msra.mxu0 %v1508
    %1958 = vmatprep.subr.mxu0 0.0
    %1959 = vmatpush2.msra.mxu0 0.0
    %1960 = vmatprep.subr.mxu0 0.0
    %1961 = vmatpush2.msra.mxu0 0.0
    %1962 = vmatprep.subr.mxu0 0.0
    %1963 = vmatpush2.msra.mxu0 0.0
    %1964 = vmatprep.subr.mxu0 0.0
    %1965 = vmatpush2.msra.mxu0 0.0
    %1966 = vmatprep.subr.mxu0 0.0
    %1967 = vmatpush2.msra.mxu0 0.0
    %1968 = vmatprep.subr.mxu0 0.0
    %1969 = vmatpush2.msra.mxu0 0.0
    %1970 = vmatprep.subr.mxu0 0.0
    %1971 = vmatpush2.msra.mxu0 0.0
    %1972 = vmatprep.subr.mxu0 0.0
    %1973 = vmatpush2.msra.mxu0 0.0
    %1974 = vmatprep.subr.mxu0 0.0
    %1975 = vmatpush2.msra.mxu0 0.0
    %1976 = vmatprep.subr.mxu0 0.0
    %1977 = vmatpush2.msra.mxu0 0.0
    %1978 = vmatprep.subr.mxu0 0.0
    %1979 = vmatpush2.msra.mxu0 0.0
    %1980 = vmatprep.subr.mxu0 0.0
    %1981 = vmatpush2.msra.mxu0 0.0
    %1982 = vmatprep.subr.mxu0 0.0
    %1983 = vmatpush2.msra.mxu0 0.0
    %1984 = vmatprep.subr.mxu0 0.0
    %1985 = vmatpush2.msra.mxu0 0.0
    %1986 = vmatprep.subr.mxu0 0.0
    %1987 = vmatpush2.msra.mxu0 0.0
    %1988 = vmatprep.subr.mxu0 0.0
    %1989 = vmatpush2.msra.mxu0 0.0
    %1990 = vmatprep.mubr.f32.mxu0 0.0
    %1991 = vmatmul.mubr.f32.gmra.mxu0 %v1555
    %v1992 = vpop.f32.mrf.mxu0
    %v1993 = vadd.f32 %v1520, %v1992
    %v1994 = vpop.f32.mrf.mxu0
    %1995 = vmatprep.mubr.f32.mxu0 0.0
    %1996 = vmatmul.mubr.f32.gmra.mxu0 %v1557
    %v1997 = vpop.f32.mrf.mxu0
    %v1998 = vadd.f32 %v1524, %v1997
    %v1999 = vpop.f32.mrf.mxu0
    %2000 = vmatprep.mubr.f32.mxu0 0.0
    %2001 = vmatmul.mubr.f32.gmra.mxu0 %v1559
    %v2002 = vpop.f32.mrf.mxu0
    %v2003 = vadd.f32 %v1528, %v2002
    %v2004 = vpop.f32.mrf.mxu0
    %2005 = vmatprep.mubr.f32.mxu0 0.0
    %2006 = vmatmul.mubr.f32.gmra.mxu0 %v1561
    %v2007 = vpop.f32.mrf.mxu0
    %v2008 = vadd.f32 %v1532, %v2007
    %v2009 = vpop.f32.mrf.mxu0
    %2010 = vmatprep.mubr.f32.mxu0 0.0
    %2011 = vmatmul.mubr.f32.gmra.mxu0 %v1563
    %v2012 = vpop.f32.mrf.mxu0
    %v2013 = vadd.f32 %v1537, %v2012
    %v2014 = vpop.f32.mrf.mxu0
    %2015 = vmatprep.mubr.f32.mxu0 0.0
    %2016 = vmatmul.mubr.f32.gmra.mxu0 %v1565
    %v2017 = vpop.f32.mrf.mxu0
    %v2018 = vadd.f32 %v1542, %v2017
    %v2019 = vpop.f32.mrf.mxu0
    %2020 = vmatprep.mubr.f32.mxu0 0.0
    %2021 = vmatmul.mubr.f32.gmra.mxu0 %v1567
    %v2022 = vpop.f32.mrf.mxu0
    %v2023 = vadd.f32 %v1547, %v2022
    %v2024 = vpop.f32.mrf.mxu0
    %2025 = vmatprep.mubr.f32.mxu0 0.0
    %2026 = vmatmul.mubr.f32.gmra.mxu0 %v1569
    %v2027 = vpop.f32.mrf.mxu0
    %v2028 = vadd.f32 %v1552, %v2027
    %v2029 = vpop.f32.mrf.mxu0
    %2030 = vdwg.mxu0
    %s2031 = scalar_lea.vmem [#allocation5], 192
    %2032 = vst [vmem:[%s2031] sm:$0xff] %v1880
    %2033 = vst [vmem:[%s2031 + $0x8] sm:$0xff] %v1882
    %2034 = vst.msk [vmem:[%s2031 + $0x10] sm:$0xff] %vm1554, %v1993
    %2035 = vst [vmem:[%s2031 + $0x18] sm:$0xff] %v1886
    %2036 = vst [vmem:[%s2031 + $0x20] sm:$0xff] %v1888
    %2037 = vst.msk [vmem:[%s2031 + $0x28] sm:$0xff] %vm1554, %v1998
    %2038 = vst [vmem:[%s2031 + $0x30] sm:$0xff] %v1892
    %2039 = vst [vmem:[%s2031 + $0x38] sm:$0xff] %v1894
    %2040 = vst.msk [vmem:[%s2031 + $0x40] sm:$0xff] %vm1554, %v2003
    %2041 = vst [vmem:[%s2031 + $0x48] sm:$0xff] %v1898
    %2042 = vst [vmem:[%s2031 + $0x50] sm:$0xff] %v1900
    %2043 = vst.msk [vmem:[%s2031 + $0x58] sm:$0xff] %vm1554, %v2008
    %2044 = vst [vmem:[%s2031 + $0x60] sm:$0xff] %v1904
    %2045 = vst [vmem:[%s2031 + $0x68] sm:$0xff] %v1906
    %2046 = vst.msk [vmem:[%s2031 + $0x70] sm:$0xff] %vm1554, %v2013
    %2047 = vst [vmem:[%s2031 + $0x78] sm:$0xff] %v1910
    %2048 = vst [vmem:[%s2031 + $0x80] sm:$0xff] %v1912
    %2049 = vst.msk [vmem:[%s2031 + $0x88] sm:$0xff] %vm1554, %v2018
    %2050 = vst [vmem:[%s2031 + $0x90] sm:$0xff] %v1916
    %2051 = vst [vmem:[%s2031 + $0x98] sm:$0xff] %v1918
    %2052 = vst.msk [vmem:[%s2031 + $0xa0] sm:$0xff] %vm1554, %v2023
    %2053 = vst [vmem:[%s2031 + $0xa8] sm:$0xff] %v1922
    %2054 = vst [vmem:[%s2031 + $0xb0] sm:$0xff] %v1924
    %2055 = vst.msk [vmem:[%s2031 + $0xb8] sm:$0xff] %vm1554, %v2028
    // Predicated region
    $region14: #{tpu_custom_call.1} parent=1 // pred_check
      _
    $region15: #{tpu_custom_call.1} parent=1 // pred_check_branch
      %2057 = sbr.rel (0) target = $region17
    $region16: #{tpu_custom_call.1} parent=1 // pred_region
      %s2059 = ssub.s32 6144, 6144
      %2060 = vsyncadd [#allocation4], %s2059
      %s2061 = sshll.u32 [#allocation5], 4
      %s2062 = int_to_ptr.vmem [resolvable:$true] %s2061
      %2067 = dma.vmem_to_hbm [thread:$0]  %s2062, 6144, %s2, [#allocation4], 384, 384, 24
    $region17: #{tpu_custom_call.1} parent=1 // pred_fallthru
      _
    // Predicated region
    $region18: #{tpu_custom_call.1} parent=1 // pred_check
      _
    $region19: #{tpu_custom_call.1} parent=1 // pred_check_branch
      %2069 = sbr.rel (0) target = $region21
    $region20: #{tpu_custom_call.1} parent=1 // pred_region
      %2070 = dma.done [#allocation4], 6144
    $region21: #{tpu_custom_call.1} parent=1 // pred_fallthru
      _
    %2071 = vsyncpa [#allocation3], 1
    %2072 = vsyncpa [#allocation4], 1

</llo_original>
